<compile_context>
chip_gen: v7x
topology: tpu7x:2x2x1
jax: 0.10.0
libtpu: 0.0.40
codegen_flags: <defaults>
</compile_context>

<pallas_src>
import jax
import jax.numpy as jnp
from jax.experimental import pallas as pl
from jax.experimental.pallas import tpu as pltpu


def _make_block_kernel(tile_h, W, c_mid):
    TH = tile_h
    bf16 = jnp.bfloat16

    def conv3x3(src, w_ref, rows_out):
        """3x3 'same' conv of src ((rows_out+2, W, C) bf16, rows already haloed).

        kw is folded into the contraction: 3 MXU matmuls with K = 3*C,
        f32 accumulation. Column zero-padding is built with two 1-column
        shifted views (no per-tap patch materialisation)."""
        rows, _, C = src.shape
        zcol = jnp.zeros((rows, 1, C), bf16)
        left = jnp.concatenate([zcol, src[:, : W - 1, :]], axis=1)   # image col c-1
        right = jnp.concatenate([src[:, 1:, :], zcol], axis=1)       # image col c+1
        a = jnp.concatenate([left, src, right], axis=-1)             # (rows, W, 3C)
        co = w_ref.shape[-1]
        acc = jnp.zeros((rows_out * W, co), jnp.float32)
        for kh in range(3):
            a_kh = a[kh:kh + rows_out].reshape(rows_out * W, 3 * C)
            acc = acc + jnp.dot(a_kh, w_ref[kh],
                                preferred_element_type=jnp.float32)
        return acc.reshape(rows_out, W, co)

    def kernel(x_main_ref, x_top_ref, x_bot_ref, w1_ref, w2_ref,
               s1_ref, b1_ref, s2_ref, b2_ref, out_ref, mid_ref):
        t = pl.program_id(1)
        n_t = pl.num_programs(1)

        # Assemble (TH + 4) input rows: [2-row top halo | TH main | 2-row bottom halo].
        # Halo views are edge-clamped by their index_map; at the image border they
        # represent the conv's zero padding, so zero them there.
        top = x_top_ref[0] * jnp.where(t > 0, 1.0, 0.0).astype(bf16)
        bot = x_bot_ref[0] * jnp.where(t < n_t - 1, 1.0, 0.0).astype(bf16)
        xfull = jnp.concatenate([top, x_main_ref[0], bot], axis=0)   # (TH+4, W, Cin)

        # conv1 -> bn1 -> relu for TH+2 rows (1-row halo each side for conv2),
        # stored in bf16 VMEM scratch (never goes to HBM).
        acc1 = conv3x3(xfull, w1_ref, TH + 2)
        y1 = jnp.maximum(acc1 * s1_ref[...] + b1_ref[...], 0.0)
        mid_ref[...] = y1.astype(bf16)

        # Rows that fall outside the image are conv2's zero padding, not conv1 output.
        @pl.when(t == 0)
        def _():
            mid_ref[0:1, :, :] = jnp.zeros((1, W, c_mid), bf16)

        @pl.when(t == n_t - 1)
        def _():
            mid_ref[TH + 1:TH + 2, :, :] = jnp.zeros((1, W, c_mid), bf16)

        # conv2 -> bn2 -> + residual -> relu for the TH output rows of this tile.
        acc2 = conv3x3(mid_ref[...], w2_ref, TH)
        y2 = acc2 * s2_ref[...] + b2_ref[...] + x_main_ref[0].astype(jnp.float32)
        out_ref[0] = jnp.maximum(y2, 0.0).astype(out_ref.dtype)

    return kernel


def basic_block_fused_nhwc(x_nhwc, params, *, eps=1e-5, tile_h=8,
                           out_dtype=jnp.bfloat16):
    """Fused BasicBlock forward in NHWC (stride=1, downsample=None)."""
    N, H, W, Cin = x_nhwc.shape
    planes = params["w1"].shape[0]
    assert params["w1"].shape == (planes, Cin, 3, 3)
    assert params["w2"].shape == (planes, planes, 3, 3)
    assert Cin == planes, "identity residual requires inplanes == planes"

    TH = tile_h if H % tile_h == 0 else H
    assert H % TH == 0 and TH % 2 == 0, "H must be divisible by an even tile_h"
    n_tiles = H // TH
    half = TH // 2  # halo views are 2-row blocks

    xb = x_nhwc.astype(jnp.bfloat16)

    # (O, I, 3, 3) -> (3 [kh], 3*I [kw-major, ci-minor], O) bf16: kw folded into K.
    def fold_w(w):
        o, i = w.shape[0], w.shape[1]
        return jnp.transpose(w, (2, 3, 1, 0)).reshape(3, 3 * i, o).astype(jnp.bfloat16)

    # Fold BatchNorm (inference mode) into f32 per-channel scale / bias.
    def fold_bn(g, b, m, v):
        s = (g / jnp.sqrt(v + eps)).astype(jnp.float32)
        return s.reshape(1, -1), (b - m * s).astype(jnp.float32).reshape(1, -1)

    w1k, w2k = fold_w(params["w1"]), fold_w(params["w2"])
    s1, b1 = fold_bn(params["g1"], params["b1"], params["m1"], params["v1"])
    s2, b2 = fold_bn(params["g2"], params["b2"], params["m2"], params["v2"])

    kernel = _make_block_kernel(TH, W, planes)

    grid_spec = pltpu.PrefetchScalarGridSpec(
        num_scalar_prefetch=0,
        grid=(N, n_tiles),
        in_specs=[
            # main TH rows of this tile (also used as the residual)
            pl.BlockSpec((1, TH, W, Cin), lambda n, t: (n, t, 0, 0)),
            # 2-row top / bottom halos (edge-clamped; zeroed in-kernel at borders)
            pl.BlockSpec((1, 2, W, Cin),
                         lambda n, t: (n, jnp.maximum(t * half - 1, 0), 0, 0)),
            pl.BlockSpec((1, 2, W, Cin),
                         lambda n, t: (n, jnp.minimum((t + 1) * half, H // 2 - 1), 0, 0)),
            pl.BlockSpec((3, 3 * Cin, planes), lambda n, t: (0, 0, 0)),
            pl.BlockSpec((3, 3 * planes, planes), lambda n, t: (0, 0, 0)),
            pl.BlockSpec((1, planes), lambda n, t: (0, 0)),
            pl.BlockSpec((1, planes), lambda n, t: (0, 0)),
            pl.BlockSpec((1, planes), lambda n, t: (0, 0)),
            pl.BlockSpec((1, planes), lambda n, t: (0, 0)),
        ],
        out_specs=pl.BlockSpec((1, TH, W, planes), lambda n, t: (n, t, 0, 0)),
        scratch_shapes=[pltpu.VMEM((TH + 2, W, planes), jnp.bfloat16)],
    )

    return pl.pallas_call(
        kernel,
        out_shape=jax.ShapeDtypeStruct((N, H, W, planes), out_dtype),
        grid_spec=grid_spec,
        compiler_params=pltpu.CompilerParams(
            dimension_semantics=("parallel", "parallel"),
            vmem_limit_bytes=32 * 1024 * 1024,
        ),
    )(xb, xb, xb, w1k, w2k, s1, b1, s2, b2)


def basic_block_forward(x_nchw, params):
    """BasicBlock.forward (stride=1, downsample=None). NCHW in / NCHW out.

    NCHW<->NHWC happens only at this module boundary; when chaining blocks the
    NHWC function above should be used directly (no per-block transposes)."""
    x = jnp.transpose(x_nchw, (0, 2, 3, 1))
    y = basic_block_fused_nhwc(x, params)
    return jnp.transpose(y, (0, 3, 1, 2)).astype(jnp.float32)


def _reference_forward(x_nchw, params, eps=1e-5):
    """Pure-JAX reference (lax.conv). Inputs / weights / intermediate are rounded
    to bf16 to mirror the kernel's storage dtypes; math is f32."""
    def r(v):
        return v.astype(jnp.bfloat16).astype(jnp.float32)

    def conv(x, w):
        return jax.lax.conv_general_dilated(
            x, w, window_strides=(1, 1), padding=((1, 1), (1, 1)),
            dimension_numbers=("NCHW", "OIHW", "NCHW"))

    def bn(x, g, b, m, v):
        s = g / jnp.sqrt(v + eps)
        return x * s[None, :, None, None] + (b - m * s)[None, :, None, None]

    xr = r(x_nchw)
    out = jax.nn.relu(bn(conv(xr, r(params["w1"])),
                         params["g1"], params["b1"], params["m1"], params["v1"]))
    out = r(out)  # kernel keeps the intermediate activation in bf16 VMEM scratch
    out = bn(conv(out, r(params["w2"])),
             params["g2"], params["b2"], params["m2"], params["v2"])
    out = out + xr
    return jax.nn.relu(out)


if __name__ == "__main__":
    key = jax.random.PRNGKey(0)
    # One stride-1 BasicBlock of ResNet layer1: inplanes == planes == 64.
    N, C, H, W = 2, 64, 16, 16
    planes = C
    ks = jax.random.split(key, 12)

    x = jax.random.normal(ks[0], (N, C, H, W), jnp.float32)
    params = {
        "w1": jax.random.normal(ks[1], (planes, C, 3, 3), jnp.float32) * 0.1,
        "g1": 1.0 + 0.1 * jax.random.normal(ks[2], (planes,), jnp.float32),
        "b1": 0.1 * jax.random.normal(ks[3], (planes,), jnp.float32),
        "m1": 0.1 * jax.random.normal(ks[4], (planes,), jnp.float32),
        "v1": jax.random.uniform(ks[5], (planes,), jnp.float32, 0.5, 1.5),
        "w2": jax.random.normal(ks[6], (planes, planes, 3, 3), jnp.float32) * 0.1,
        "g2": 1.0 + 0.1 * jax.random.normal(ks[7], (planes,), jnp.float32),
        "b2": 0.1 * jax.random.normal(ks[8], (planes,), jnp.float32),
        "m2": 0.1 * jax.random.normal(ks[9], (planes,), jnp.float32),
        "v2": jax.random.uniform(ks[10], (planes,), jnp.float32, 0.5, 1.5),
    }

    out = jax.jit(basic_block_forward)(x, params)
    out = jax.block_until_ready(out)

    ref = _reference_forward(x, params)
    assert out.shape == (N, planes, H, W)
    max_err = jnp.max(jnp.abs(out - ref))
    assert jnp.allclose(out, ref, atol=2e-2, rtol=2e-2), (
        f"mismatch vs reference (max abs err = {max_err})")

    print("KERNEL_OK")
</pallas_src>

<mosaic_0001>
module attributes {stable_mosaic.version = 11 : i64} {
  func.func @kernel(%arg0: i32, %arg1: i32, %arg2: memref<1x8x16x64xbf16, #tpu.memory_space<vmem>>, %arg3: memref<1x2x16x64xbf16, #tpu.memory_space<vmem>>, %arg4: memref<1x2x16x64xbf16, #tpu.memory_space<vmem>>, %arg5: memref<3x192x64xbf16, #tpu.memory_space<vmem>>, %arg6: memref<3x192x64xbf16, #tpu.memory_space<vmem>>, %arg7: memref<1x64xf32, #tpu.memory_space<vmem>>, %arg8: memref<1x64xf32, #tpu.memory_space<vmem>>, %arg9: memref<1x64xf32, #tpu.memory_space<vmem>>, %arg10: memref<1x64xf32, #tpu.memory_space<vmem>>, %arg11: memref<1x8x16x64xbf16, #tpu.memory_space<vmem>>, %arg12: memref<10x16x64xbf16, #tpu.memory_space<vmem>>) attributes {dimension_semantics = [#tpu.dimension_semantics<parallel>, #tpu.dimension_semantics<parallel>], iteration_bounds = array<i64: 2, 2>, scalar_prefetch = 0 : i64, scratch_operands = 1 : i64, tpu.core_type = #tpu.core_type<tc>, window_params = [{transform_indices = @transform_0, window_bounds = array<i64: 1, 8, 16, 64>}, {transform_indices = @transform_1, window_bounds = array<i64: 1, 2, 16, 64>}, {transform_indices = @transform_2, window_bounds = array<i64: 1, 2, 16, 64>}, {pipeline_mode = #tpu.pipeline_mode<synchronous>, transform_indices = @transform_3, window_bounds = array<i64: 3, 192, 64>}, {pipeline_mode = #tpu.pipeline_mode<synchronous>, transform_indices = @transform_4, window_bounds = array<i64: 3, 192, 64>}, {pipeline_mode = #tpu.pipeline_mode<synchronous>, transform_indices = @transform_5, window_bounds = array<i64: 1, 64>}, {pipeline_mode = #tpu.pipeline_mode<synchronous>, transform_indices = @transform_6, window_bounds = array<i64: 1, 64>}, {pipeline_mode = #tpu.pipeline_mode<synchronous>, transform_indices = @transform_7, window_bounds = array<i64: 1, 64>}, {pipeline_mode = #tpu.pipeline_mode<synchronous>, transform_indices = @transform_8, window_bounds = array<i64: 1, 64>}, {transform_indices = @transform_9, window_bounds = array<i64: 1, 8, 16, 64>}]} {
    %c0 = arith.constant 0 : index
    %c0_0 = arith.constant 0 : index
    %c0_1 = arith.constant 0 : index
    %c0_2 = arith.constant 0 : index
    %0 = vector.load %arg3[%c0, %c0_0, %c0_1, %c0_2] : memref<1x2x16x64xbf16, #tpu.memory_space<vmem>>, vector<1x2x16x64xbf16>
    %1 = vector.shape_cast %0 : vector<1x2x16x64xbf16> to vector<2x16x64xbf16>
    %c0_i32 = arith.constant 0 : i32
    %2 = arith.cmpi sgt, %arg1, %c0_i32 : i32
    %cst = arith.constant 1.000000e+00 : f32
    %cst_3 = arith.constant 0.000000e+00 : f32
    %3 = arith.select %2, %cst, %cst_3 : f32
    %4 = arith.truncf %3 : f32 to bf16
    %5 = vector.broadcast %4 : bf16 to vector<2x16x64xbf16>
    %6 = arith.mulf %1, %5 : vector<2x16x64xbf16>
    %c0_4 = arith.constant 0 : index
    %c0_5 = arith.constant 0 : index
    %c0_6 = arith.constant 0 : index
    %c0_7 = arith.constant 0 : index
    %7 = vector.load %arg4[%c0_4, %c0_5, %c0_6, %c0_7] : memref<1x2x16x64xbf16, #tpu.memory_space<vmem>>, vector<1x2x16x64xbf16>
    %8 = vector.shape_cast %7 : vector<1x2x16x64xbf16> to vector<2x16x64xbf16>
    %c1_i32 = arith.constant 1 : i32
    %9 = arith.cmpi slt, %arg1, %c1_i32 : i32
    %cst_8 = arith.constant 1.000000e+00 : f32
    %cst_9 = arith.constant 0.000000e+00 : f32
    %10 = arith.select %9, %cst_8, %cst_9 : f32
    %11 = arith.truncf %10 : f32 to bf16
    %12 = vector.broadcast %11 : bf16 to vector<2x16x64xbf16>
    %13 = arith.mulf %8, %12 : vector<2x16x64xbf16>
    %c0_10 = arith.constant 0 : index
    %c0_11 = arith.constant 0 : index
    %c0_12 = arith.constant 0 : index
    %c0_13 = arith.constant 0 : index
    %14 = vector.load %arg2[%c0_10, %c0_11, %c0_12, %c0_13] : memref<1x8x16x64xbf16, #tpu.memory_space<vmem>>, vector<1x8x16x64xbf16>
    %15 = vector.shape_cast %14 : vector<1x8x16x64xbf16> to vector<8x16x64xbf16>
    %16 = tpu.concatenate %6, %15, %13 in 0 : vector<2x16x64xbf16>, vector<8x16x64xbf16>, vector<2x16x64xbf16> -> vector<12x16x64xbf16>
    %cst_14 = arith.constant 0.000000e+00 : bf16
    %17 = vector.broadcast %cst_14 : bf16 to vector<12x1x64xbf16>
    %18 = vector.extract_strided_slice %16 {offsets = [0, 0, 0], sizes = [12, 15, 64], strides = [1, 1, 1]} : vector<12x16x64xbf16> to vector<12x15x64xbf16>
    %19 = tpu.concatenate %17, %18 in 1 : vector<12x1x64xbf16>, vector<12x15x64xbf16> -> vector<12x16x64xbf16>
    %20 = vector.extract_strided_slice %16 {offsets = [0, 1, 0], sizes = [12, 15, 64], strides = [1, 1, 1]} : vector<12x16x64xbf16> to vector<12x15x64xbf16>
    %21 = tpu.concatenate %20, %17 in 1 : vector<12x15x64xbf16>, vector<12x1x64xbf16> -> vector<12x16x64xbf16>
    %22 = tpu.concatenate %19, %16, %21 in 2 : vector<12x16x64xbf16>, vector<12x16x64xbf16>, vector<12x16x64xbf16> -> vector<12x16x192xbf16>
    %cst_15 = arith.constant 0.000000e+00 : f32
    %23 = vector.broadcast %cst_15 : f32 to vector<160x64xf32>
    %24 = vector.extract_strided_slice %22 {offsets = [0, 0, 0], sizes = [10, 16, 192], strides = [1, 1, 1]} : vector<12x16x192xbf16> to vector<10x16x192xbf16>
    %25 = vector.shape_cast %24 : vector<10x16x192xbf16> to vector<160x192xbf16>
    %c0_16 = arith.constant 0 : index
    %c0_17 = arith.constant 0 : index
    %c0_18 = arith.constant 0 : index
    %26 = vector.load %arg5[%c0_16, %c0_17, %c0_18] : memref<3x192x64xbf16, #tpu.memory_space<vmem>>, vector<1x192x64xbf16>
    %27 = vector.shape_cast %26 : vector<1x192x64xbf16> to vector<192x64xbf16>
    %cst_19 = arith.constant dense<0.000000e+00> : vector<160x64xf32>
    %28 = tpu.matmul %25, %27, %cst_19 {dimension_numbers = #tpu.dot_dimension_numbers<[1], [0], [0], [1], [0, 0, 1, 1], [], []>} : vector<160x192xbf16>, vector<192x64xbf16>, vector<160x64xf32> -> vector<160x64xf32>
    %29 = arith.addf %23, %28 : vector<160x64xf32>
    %30 = vector.extract_strided_slice %22 {offsets = [1, 0, 0], sizes = [10, 16, 192], strides = [1, 1, 1]} : vector<12x16x192xbf16> to vector<10x16x192xbf16>
    %31 = vector.shape_cast %30 : vector<10x16x192xbf16> to vector<160x192xbf16>
    %c1 = arith.constant 1 : index
    %c0_20 = arith.constant 0 : index
    %c0_21 = arith.constant 0 : index
    %32 = vector.load %arg5[%c1, %c0_20, %c0_21] : memref<3x192x64xbf16, #tpu.memory_space<vmem>>, vector<1x192x64xbf16>
    %33 = vector.shape_cast %32 : vector<1x192x64xbf16> to vector<192x64xbf16>
    %cst_22 = arith.constant dense<0.000000e+00> : vector<160x64xf32>
    %34 = tpu.matmul %31, %33, %cst_22 {dimension_numbers = #tpu.dot_dimension_numbers<[1], [0], [0], [1], [0, 0, 1, 1], [], []>} : vector<160x192xbf16>, vector<192x64xbf16>, vector<160x64xf32> -> vector<160x64xf32>
    %35 = arith.addf %29, %34 : vector<160x64xf32>
    %36 = vector.extract_strided_slice %22 {offsets = [2, 0, 0], sizes = [10, 16, 192], strides = [1, 1, 1]} : vector<12x16x192xbf16> to vector<10x16x192xbf16>
    %37 = vector.shape_cast %36 : vector<10x16x192xbf16> to vector<160x192xbf16>
    %c2 = arith.constant 2 : index
    %c0_23 = arith.constant 0 : index
    %c0_24 = arith.constant 0 : index
    %38 = vector.load %arg5[%c2, %c0_23, %c0_24] : memref<3x192x64xbf16, #tpu.memory_space<vmem>>, vector<1x192x64xbf16>
    %39 = vector.shape_cast %38 : vector<1x192x64xbf16> to vector<192x64xbf16>
    %cst_25 = arith.constant dense<0.000000e+00> : vector<160x64xf32>
    %40 = tpu.matmul %37, %39, %cst_25 {dimension_numbers = #tpu.dot_dimension_numbers<[1], [0], [0], [1], [0, 0, 1, 1], [], []>} : vector<160x192xbf16>, vector<192x64xbf16>, vector<160x64xf32> -> vector<160x64xf32>
    %41 = arith.addf %35, %40 : vector<160x64xf32>
    %42 = vector.shape_cast %41 : vector<160x64xf32> to vector<10x16x64xf32>
    %c0_26 = arith.constant 0 : index
    %c0_27 = arith.constant 0 : index
    %43 = vector.load %arg7[%c0_26, %c0_27] : memref<1x64xf32, #tpu.memory_space<vmem>>, vector<1x64xf32>
    %44 = vector.shape_cast %43 : vector<1x64xf32> to vector<1x1x64xf32>
    %45 = vector.broadcast %44 : vector<1x1x64xf32> to vector<10x16x64xf32>
    %46 = arith.mulf %42, %45 : vector<10x16x64xf32>
    %c0_28 = arith.constant 0 : index
    %c0_29 = arith.constant 0 : index
    %47 = vector.load %arg8[%c0_28, %c0_29] : memref<1x64xf32, #tpu.memory_space<vmem>>, vector<1x64xf32>
    %48 = vector.shape_cast %47 : vector<1x64xf32> to vector<1x1x64xf32>
    %49 = vector.broadcast %48 : vector<1x1x64xf32> to vector<10x16x64xf32>
    %50 = arith.addf %46, %49 : vector<10x16x64xf32>
    %cst_30 = arith.constant 0.000000e+00 : f32
    %51 = vector.broadcast %cst_30 : f32 to vector<10x16x64xf32>
    %52 = arith.maximumf %50, %51 : vector<10x16x64xf32>
    %53 = arith.truncf %52 : vector<10x16x64xf32> to vector<10x16x64xbf16>
    %c0_31 = arith.constant 0 : index
    %c0_32 = arith.constant 0 : index
    %c0_33 = arith.constant 0 : index
    %54 = vector.load %arg12[%c0_31, %c0_32, %c0_33] : memref<10x16x64xbf16, #tpu.memory_space<vmem>>, vector<10x16x64xbf16>
    tpu.vector_store %arg12[%c0_31, %c0_32, %c0_33], %53 {strides = array<i32>} : memref<10x16x64xbf16, #tpu.memory_space<vmem>>, vector<10x16x64xbf16>,
    %c0_i32_34 = arith.constant 0 : i32
    %55 = arith.cmpi eq, %arg1, %c0_i32_34 : i32
    %56 = arith.extui %55 : i1 to i32
    %c0_i32_35 = arith.constant 0 : i32
    %57 = arith.cmpi ne, %56, %c0_i32_35 : i32
    scf.if %57 {
      %cst_68 = arith.constant 0.000000e+00 : bf16
      %106 = vector.broadcast %cst_68 : bf16 to vector<1x16x64xbf16>
      %c0_69 = arith.constant 0 : index
      %c0_70 = arith.constant 0 : index
      %c0_71 = arith.constant 0 : index
      %107 = vector.load %arg12[%c0_69, %c0_70, %c0_71] : memref<10x16x64xbf16, #tpu.memory_space<vmem>>, vector<1x16x64xbf16>
      tpu.vector_store %arg12[%c0_69, %c0_70, %c0_71], %106 {strides = array<i32>} : memref<10x16x64xbf16, #tpu.memory_space<vmem>>, vector<1x16x64xbf16>,
    } else {
    }
    %c1_i32_36 = arith.constant 1 : i32
    %58 = arith.cmpi eq, %arg1, %c1_i32_36 : i32
    %59 = arith.extui %58 : i1 to i32
    %c0_i32_37 = arith.constant 0 : i32
    %60 = arith.cmpi ne, %59, %c0_i32_37 : i32
    scf.if %60 {
      %cst_68 = arith.constant 0.000000e+00 : bf16
      %106 = vector.broadcast %cst_68 : bf16 to vector<1x16x64xbf16>
      %c9 = arith.constant 9 : index
      %c0_69 = arith.constant 0 : index
      %c0_70 = arith.constant 0 : index
      %107 = vector.load %arg12[%c9, %c0_69, %c0_70] : memref<10x16x64xbf16, #tpu.memory_space<vmem>>, vector<1x16x64xbf16>
      tpu.vector_store %arg12[%c9, %c0_69, %c0_70], %106 {strides = array<i32>} : memref<10x16x64xbf16, #tpu.memory_space<vmem>>, vector<1x16x64xbf16>,
    } else {
    }
    %c0_38 = arith.constant 0 : index
    %c0_39 = arith.constant 0 : index
    %c0_40 = arith.constant 0 : index
    %61 = vector.load %arg12[%c0_38, %c0_39, %c0_40] : memref<10x16x64xbf16, #tpu.memory_space<vmem>>, vector<10x16x64xbf16>
    %cst_41 = arith.constant 0.000000e+00 : bf16
    %62 = vector.broadcast %cst_41 : bf16 to vector<10x1x64xbf16>
    %63 = vector.extract_strided_slice %61 {offsets = [0, 0, 0], sizes = [10, 15, 64], strides = [1, 1, 1]} : vector<10x16x64xbf16> to vector<10x15x64xbf16>
    %64 = tpu.concatenate %62, %63 in 1 : vector<10x1x64xbf16>, vector<10x15x64xbf16> -> vector<10x16x64xbf16>
    %65 = vector.extract_strided_slice %61 {offsets = [0, 1, 0], sizes = [10, 15, 64], strides = [1, 1, 1]} : vector<10x16x64xbf16> to vector<10x15x64xbf16>
    %66 = tpu.concatenate %65, %62 in 1 : vector<10x15x64xbf16>, vector<10x1x64xbf16> -> vector<10x16x64xbf16>
    %67 = tpu.concatenate %64, %61, %66 in 2 : vector<10x16x64xbf16>, vector<10x16x64xbf16>, vector<10x16x64xbf16> -> vector<10x16x192xbf16>
    %cst_42 = arith.constant 0.000000e+00 : f32
    %68 = vector.broadcast %cst_42 : f32 to vector<128x64xf32>
    %69 = vector.extract_strided_slice %67 {offsets = [0, 0, 0], sizes = [8, 16, 192], strides = [1, 1, 1]} : vector<10x16x192xbf16> to vector<8x16x192xbf16>
    %70 = vector.shape_cast %69 : vector<8x16x192xbf16> to vector<128x192xbf16>
    %c0_43 = arith.constant 0 : index
    %c0_44 = arith.constant 0 : index
    %c0_45 = arith.constant 0 : index
    %71 = vector.load %arg6[%c0_43, %c0_44, %c0_45] : memref<3x192x64xbf16, #tpu.memory_space<vmem>>, vector<1x192x64xbf16>
    %72 = vector.shape_cast %71 : vector<1x192x64xbf16> to vector<192x64xbf16>
    %cst_46 = arith.constant dense<0.000000e+00> : vector<128x64xf32>
    %73 = tpu.matmul %70, %72, %cst_46 {dimension_numbers = #tpu.dot_dimension_numbers<[1], [0], [0], [1], [0, 0, 1, 1], [], []>} : vector<128x192xbf16>, vector<192x64xbf16>, vector<128x64xf32> -> vector<128x64xf32>
    %74 = arith.addf %68, %73 : vector<128x64xf32>
    %75 = vector.extract_strided_slice %67 {offsets = [1, 0, 0], sizes = [8, 16, 192], strides = [1, 1, 1]} : vector<10x16x192xbf16> to vector<8x16x192xbf16>
    %76 = vector.shape_cast %75 : vector<8x16x192xbf16> to vector<128x192xbf16>
    %c1_47 = arith.constant 1 : index
    %c0_48 = arith.constant 0 : index
    %c0_49 = arith.constant 0 : index
    %77 = vector.load %arg6[%c1_47, %c0_48, %c0_49] : memref<3x192x64xbf16, #tpu.memory_space<vmem>>, vector<1x192x64xbf16>
    %78 = vector.shape_cast %77 : vector<1x192x64xbf16> to vector<192x64xbf16>
    %cst_50 = arith.constant dense<0.000000e+00> : vector<128x64xf32>
    %79 = tpu.matmul %76, %78, %cst_50 {dimension_numbers = #tpu.dot_dimension_numbers<[1], [0], [0], [1], [0, 0, 1, 1], [], []>} : vector<128x192xbf16>, vector<192x64xbf16>, vector<128x64xf32> -> vector<128x64xf32>
    %80 = arith.addf %74, %79 : vector<128x64xf32>
    %81 = vector.extract_strided_slice %67 {offsets = [2, 0, 0], sizes = [8, 16, 192], strides = [1, 1, 1]} : vector<10x16x192xbf16> to vector<8x16x192xbf16>
    %82 = vector.shape_cast %81 : vector<8x16x192xbf16> to vector<128x192xbf16>
    %c2_51 = arith.constant 2 : index
    %c0_52 = arith.constant 0 : index
    %c0_53 = arith.constant 0 : index
    %83 = vector.load %arg6[%c2_51, %c0_52, %c0_53] : memref<3x192x64xbf16, #tpu.memory_space<vmem>>, vector<1x192x64xbf16>
    %84 = vector.shape_cast %83 : vector<1x192x64xbf16> to vector<192x64xbf16>
    %cst_54 = arith.constant dense<0.000000e+00> : vector<128x64xf32>
    %85 = tpu.matmul %82, %84, %cst_54 {dimension_numbers = #tpu.dot_dimension_numbers<[1], [0], [0], [1], [0, 0, 1, 1], [], []>} : vector<128x192xbf16>, vector<192x64xbf16>, vector<128x64xf32> -> vector<128x64xf32>
    %86 = arith.addf %80, %85 : vector<128x64xf32>
    %87 = vector.shape_cast %86 : vector<128x64xf32> to vector<8x16x64xf32>
    %c0_55 = arith.constant 0 : index
    %c0_56 = arith.constant 0 : index
    %88 = vector.load %arg9[%c0_55, %c0_56] : memref<1x64xf32, #tpu.memory_space<vmem>>, vector<1x64xf32>
    %89 = vector.shape_cast %88 : vector<1x64xf32> to vector<1x1x64xf32>
    %90 = vector.broadcast %89 : vector<1x1x64xf32> to vector<8x16x64xf32>
    %91 = arith.mulf %87, %90 : vector<8x16x64xf32>
    %c0_57 = arith.constant 0 : index
    %c0_58 = arith.constant 0 : index
    %92 = vector.load %arg10[%c0_57, %c0_58] : memref<1x64xf32, #tpu.memory_space<vmem>>, vector<1x64xf32>
    %93 = vector.shape_cast %92 : vector<1x64xf32> to vector<1x1x64xf32>
    %94 = vector.broadcast %93 : vector<1x1x64xf32> to vector<8x16x64xf32>
    %95 = arith.addf %91, %94 : vector<8x16x64xf32>
    %c0_59 = arith.constant 0 : index
    %c0_60 = arith.constant 0 : index
    %c0_61 = arith.constant 0 : index
    %c0_62 = arith.constant 0 : index
    %96 = vector.load %arg2[%c0_59, %c0_60, %c0_61, %c0_62] : memref<1x8x16x64xbf16, #tpu.memory_space<vmem>>, vector<1x8x16x64xbf16>
    %97 = vector.shape_cast %96 : vector<1x8x16x64xbf16> to vector<8x16x64xbf16>
    %98 = arith.extf %97 : vector<8x16x64xbf16> to vector<8x16x64xf32>
    %99 = arith.addf %95, %98 : vector<8x16x64xf32>
    %cst_63 = arith.constant 0.000000e+00 : f32
    %100 = vector.broadcast %cst_63 : f32 to vector<8x16x64xf32>
    %101 = arith.maximumf %99, %100 : vector<8x16x64xf32>
    %102 = arith.truncf %101 : vector<8x16x64xf32> to vector<8x16x64xbf16>
    %c0_64 = arith.constant 0 : index
    %c0_65 = arith.constant 0 : index
    %c0_66 = arith.constant 0 : index
    %c0_67 = arith.constant 0 : index
    %103 = vector.load %arg11[%c0_64, %c0_65, %c0_66, %c0_67] : memref<1x8x16x64xbf16, #tpu.memory_space<vmem>>, vector<1x8x16x64xbf16>
    %104 = vector.shape_cast %103 : vector<1x8x16x64xbf16> to vector<8x16x64xbf16>
    %105 = vector.shape_cast %102 : vector<8x16x64xbf16> to vector<1x8x16x64xbf16>
    tpu.vector_store %arg11[%c0_64, %c0_65, %c0_66, %c0_67], %105 {strides = array<i32>} : memref<1x8x16x64xbf16, #tpu.memory_space<vmem>>, vector<1x8x16x64xbf16>,
    return
  }
  func.func @transform_0(%arg0: i32, %arg1: i32) -> (i32, i32, i32, i32) {
    %c0_i32 = arith.constant 0 : i32
    %c0_i32_0 = arith.constant 0 : i32
    %c0_i32_1 = arith.constant 0 : i32
    return %arg0, %arg1, %c0_i32, %c0_i32_0 : i32, i32, i32, i32
  }
  func.func @transform_1(%arg0: i32, %arg1: i32) -> (i32, i32, i32, i32) {
    %c4_i32 = arith.constant 4 : i32
    %0 = arith.muli %arg1, %c4_i32 : i32
    %c1_i32 = arith.constant 1 : i32
    %1 = arith.subi %0, %c1_i32 : i32
    %c0_i32 = arith.constant 0 : i32
    %2 = arith.maxsi %1, %c0_i32 : i32
    %c0_i32_0 = arith.constant 0 : i32
    %c0_i32_1 = arith.constant 0 : i32
    %c0_i32_2 = arith.constant 0 : i32
    return %arg0, %2, %c0_i32_0, %c0_i32_1 : i32, i32, i32, i32
  }
  func.func @transform_2(%arg0: i32, %arg1: i32) -> (i32, i32, i32, i32) {
    %c1_i32 = arith.constant 1 : i32
    %0 = arith.addi %arg1, %c1_i32 : i32
    %c4_i32 = arith.constant 4 : i32
    %1 = arith.muli %0, %c4_i32 : i32
    %c7_i32 = arith.constant 7 : i32
    %2 = arith.minsi %1, %c7_i32 : i32
    %c0_i32 = arith.constant 0 : i32
    %c0_i32_0 = arith.constant 0 : i32
    %c0_i32_1 = arith.constant 0 : i32
    return %arg0, %2, %c0_i32, %c0_i32_0 : i32, i32, i32, i32
  }
  func.func @transform_3(%arg0: i32, %arg1: i32) -> (i32, i32, i32) {
    %c0_i32 = arith.constant 0 : i32
    %c0_i32_0 = arith.constant 0 : i32
    %c0_i32_1 = arith.constant 0 : i32
    %c0_i32_2 = arith.constant 0 : i32
    return %c0_i32, %c0_i32_0, %c0_i32_1 : i32, i32, i32
  }
  func.func @transform_4(%arg0: i32, %arg1: i32) -> (i32, i32, i32) {
    %c0_i32 = arith.constant 0 : i32
    %c0_i32_0 = arith.constant 0 : i32
    %c0_i32_1 = arith.constant 0 : i32
    %c0_i32_2 = arith.constant 0 : i32
    return %c0_i32, %c0_i32_0, %c0_i32_1 : i32, i32, i32
  }
  func.func @transform_5(%arg0: i32, %arg1: i32) -> (i32, i32) {
    %c0_i32 = arith.constant 0 : i32
    %c0_i32_0 = arith.constant 0 : i32
    %c0_i32_1 = arith.constant 0 : i32
    return %c0_i32, %c0_i32_0 : i32, i32
  }
  func.func @transform_6(%arg0: i32, %arg1: i32) -> (i32, i32) {
    %c0_i32 = arith.constant 0 : i32
    %c0_i32_0 = arith.constant 0 : i32
    %c0_i32_1 = arith.constant 0 : i32
    return %c0_i32, %c0_i32_0 : i32, i32
  }
  func.func @transform_7(%arg0: i32, %arg1: i32) -> (i32, i32) {
    %c0_i32 = arith.constant 0 : i32
    %c0_i32_0 = arith.constant 0 : i32
    %c0_i32_1 = arith.constant 0 : i32
    return %c0_i32, %c0_i32_0 : i32, i32
  }
  func.func @transform_8(%arg0: i32, %arg1: i32) -> (i32, i32) {
    %c0_i32 = arith.constant 0 : i32
    %c0_i32_0 = arith.constant 0 : i32
    %c0_i32_1 = arith.constant 0 : i32
    return %c0_i32, %c0_i32_0 : i32, i32
  }
  func.func @transform_9(%arg0: i32, %arg1: i32) -> (i32, i32, i32, i32) {
    %c0_i32 = arith.constant 0 : i32
    %c0_i32_0 = arith.constant 0 : i32
    %c0_i32_1 = arith.constant 0 : i32
    return %arg0, %arg1, %c0_i32, %c0_i32_0 : i32, i32, i32, i32
  }
}

</mosaic_0001>

<llo_original>
// kernel: basic_block_forward.1
$region0: #{basic_block_forward.1}
  #allocation0 [shape = 'u32[]', space=smem, size = 0x4, offset = 0x4, fixed_abs, tag = 'smem constant byte address 0x4 - core index']
  #allocation1 [shape = 'u32[144,128]{1,0:T(1,128)}', space=vmem, size = 0x12000, scoped, tag = 'internal scratch']
  #allocation2 [shape = 'bf16[10,16,64]{2,1,0:T(16,128)(2,1)}', space=vmem, size = 0xa000, scoped, tag = 'scratch operand']
  %s0 = inlined_call_operand.vmem [shape: bf16[2,16,16,64], index: 0, kind: input, shape index: {}, may-alias: {0,1,2}]
  %s1 = inlined_call_operand.vmem [shape: bf16[2,16,16,64], index: 1, kind: input, shape index: {}, may-alias: {0,1,2}]
  %s2 = inlined_call_operand.vmem [shape: bf16[2,16,16,64], index: 2, kind: input, shape index: {}, may-alias: {0,1,2}]
  %s3 = inlined_call_operand.vmem [shape: bf16[3,192,64], index: 3, kind: input, shape index: {}]
  %s4 = inlined_call_operand.vmem [shape: bf16[3,192,64], index: 4, kind: input, shape index: {}]
  %s5 = inlined_call_operand.vmem [shape: f32[1,64], index: 5, kind: input, shape index: {}]
  %s6 = inlined_call_operand.vmem [shape: f32[1,64], index: 6, kind: input, shape index: {}]
  %s7 = inlined_call_operand.vmem [shape: f32[1,64], index: 7, kind: input, shape index: {}]
  %s8 = inlined_call_operand.vmem [shape: f32[1,64], index: 8, kind: input, shape index: {}]
  %s9 = inlined_call_operand.vmem [shape: bf16[2,16,16,64], index: 9, kind: output, shape index: {}]
  %s10 = sld [smem:[#allocation0]]
  $region77: #{basic_block_forward.1} parent=0
    _
  %s12 = ssub.s32 1, %s10
  %s13 = scalar_select 0, %s12, %s10
  loop: start=0, step=1, limit=6
  $region2: #{basic_block_forward.1} parent=0 // loop_pre_header
    _
  $region3: #{basic_block_forward.1} parent=0 // loop_header
    %s15 = sphi 0, %s19
    %p16 = scmp.ge.s32.totalorder %s15, 6
    %s22 = sphi 0, %s34
    %s23 = sphi 0, %s30
    %s24 = sphi 0, %s22
    %s25 = sphi 0, %s23
    %s26 = sphi 0, %s24
    %s27 = sphi 0, %s25
    %s39 = sphi 0, %s41
    %s42 = sphi 0, %s39
    %s43 = sphi 0, %s42
    %s59 = sphi 0, %s43
    %s75 = sphi 0, %s77
    %s78 = sphi 0, %s75
    %s79 = sphi 0, %s78
    %s95 = sphi 0, %s79
    %s111 = sphi 0, %s113
    %s114 = sphi 0, %s111
    %s115 = sphi 0, %s114
    %s131 = sphi 0, %s115
    %s135 = sphi 0, %s135
    %s137 = sphi 0, %s135
    %s138 = sphi 0, %s137
    %s152 = sphi 0, %s138
    %s156 = sphi 0, %s156
    %s158 = sphi 0, %s156
    %s159 = sphi 0, %s158
    %s173 = sphi 0, %s159
    %s177 = sphi 0, %s177
    %s179 = sphi 0, %s177
    %s180 = sphi 0, %s179
    %s194 = sphi 0, %s180
    %s198 = sphi 0, %s198
    %s200 = sphi 0, %s198
    %s201 = sphi 0, %s200
    %s215 = sphi 0, %s201
    %s219 = sphi 0, %s219
    %s221 = sphi 0, %s219
    %s222 = sphi 0, %s221
    %s236 = sphi 0, %s222
    %s240 = sphi 0, %s240
    %s242 = sphi 0, %s240
    %s243 = sphi 0, %s242
    %s257 = sphi 0, %s243
    %s265 = sphi 0, %s267
    %s268 = sphi 0, %s265
    %s269 = sphi 0, %s268
    %s285 = sphi 0, %s269
  $region4: #{basic_block_forward.1} parent=0 // loop_header_branch
    %18 = sbr.rel (%p16) target = $region8
  $region5: #{basic_block_forward.1} parent=0 // loop_body
    %s20 = ssub.s32 %s15, 1
    %s21 = ssub.s32 %s15, 2
    %s28 = sadd.s32 1, %s23
    %p29 = scmp.ge.s32.totalorder %s28, 2
    %s30 = scalar_select %p29, 0, %s28
    %s31 = sadd.s32 1, %s22
    %s32 = scalar_select %p29, %s31, %s22
    %p33 = scmp.ge.s32.totalorder %s32, 2
    %s34 = scalar_select %p33, 0, %s32
    %s35 = ssub.s32 %s22, %s34
    %s36 = ssub.s32 %s23, %s30
    %s37 = sor.u32 %s35, %s36
    %p38 = scmp.eq.s32.totalorder %s37, 0
    %s40 = sadd.s32 %s39, 1
    %s41 = scalar_select %p38, %s39, %s40
    %p44 = pneg %p38
    %p45 = scmp.eq.s32.totalorder %s15, 3
    %p46 = por %p44, %p45
    %p47 = scmp.ne.s32.totalorder %s39, %s42
    %p48 = scmp.eq.s32.totalorder %s15, 0
    %p49 = por %p47, %p48
    %p50 = scmp.ne.s32.totalorder %s39, %s42
    %p51 = scmp.eq.s32.totalorder %s20, 3
    %p52 = por %p50, %p51
    %p53 = scmp.ne.s32.totalorder %s42, %s43
    %p54 = scmp.eq.s32.totalorder %s20, 0
    %p55 = por %p53, %p54
    %p56 = scmp.ne.s32.totalorder %s42, %s43
    %p57 = scmp.eq.s32.totalorder %s21, 3
    %p58 = por %p56, %p57
    %p60 = scmp.ne.s32.totalorder %s43, %s59
    %p61 = scmp.eq.s32.totalorder %s21, 0
    %p62 = por %p60, %p61
    %s63 = smul.u32 %s23, 4
    %s64 = ssub.s32 %s63, 1
    %p65 = scmp.gt.s32.totalorder %s64, 0
    %s66 = scalar_select %p65, %s64, 0
    %s67 = smul.u32 %s30, 4
    %s68 = ssub.s32 %s67, 1
    %p69 = scmp.gt.s32.totalorder %s68, 0
    %s70 = scalar_select %p69, %s68, 0
    %s71 = ssub.s32 %s22, %s34
    %s72 = ssub.s32 %s66, %s70
    %s73 = sor.u32 %s71, %s72
    %p74 = scmp.eq.s32.totalorder %s73, 0
    %s76 = sadd.s32 %s75, 1
    %s77 = scalar_select %p74, %s75, %s76
    %p80 = pneg %p74
    %p81 = scmp.eq.s32.totalorder %s15, 3
    %p82 = por %p80, %p81
    %p83 = scmp.ne.s32.totalorder %s75, %s78
    %p84 = scmp.eq.s32.totalorder %s15, 0
    %p85 = por %p83, %p84
    %p86 = scmp.ne.s32.totalorder %s75, %s78
    %p87 = scmp.eq.s32.totalorder %s20, 3
    %p88 = por %p86, %p87
    %p89 = scmp.ne.s32.totalorder %s78, %s79
    %p90 = scmp.eq.s32.totalorder %s20, 0
    %p91 = por %p89, %p90
    %p92 = scmp.ne.s32.totalorder %s78, %s79
    %p93 = scmp.eq.s32.totalorder %s21, 3
    %p94 = por %p92, %p93
    %p96 = scmp.ne.s32.totalorder %s79, %s95
    %p97 = scmp.eq.s32.totalorder %s21, 0
    %p98 = por %p96, %p97
    %s99 = sadd.s32 %s23, 1
    %s100 = smul.u32 %s99, 4
    %p101 = scmp.lt.s32.totalorder %s100, 7
    %s102 = scalar_select %p101, %s100, 7
    %s103 = sadd.s32 %s30, 1
    %s104 = smul.u32 %s103, 4
    %p105 = scmp.lt.s32.totalorder %s104, 7
    %s106 = scalar_select %p105, %s104, 7
    %s107 = ssub.s32 %s22, %s34
    %s108 = ssub.s32 %s102, %s106
    %s109 = sor.u32 %s107, %s108
    %p110 = scmp.eq.s32.totalorder %s109, 0
    %s112 = sadd.s32 %s111, 1
    %s113 = scalar_select %p110, %s111, %s112
    %p116 = pneg %p110
    %p117 = scmp.eq.s32.totalorder %s15, 3
    %p118 = por %p116, %p117
    %p119 = scmp.ne.s32.totalorder %s111, %s114
    %p120 = scmp.eq.s32.totalorder %s15, 0
    %p121 = por %p119, %p120
    %p122 = scmp.ne.s32.totalorder %s111, %s114
    %p123 = scmp.eq.s32.totalorder %s20, 3
    %p124 = por %p122, %p123
    %p125 = scmp.ne.s32.totalorder %s114, %s115
    %p126 = scmp.eq.s32.totalorder %s20, 0
    %p127 = por %p125, %p126
    %p128 = scmp.ne.s32.totalorder %s114, %s115
    %p129 = scmp.eq.s32.totalorder %s21, 3
    %p130 = por %p128, %p129
    %p132 = scmp.ne.s32.totalorder %s115, %s131
    %p133 = scmp.eq.s32.totalorder %s21, 0
    %p134 = por %p132, %p133
    %s136 = sadd.s32 %s135, 1
    %p139 = scmp.eq.s32.totalorder %s15, 3
    %p140 = scmp.ne.s32.totalorder %s135, %s137
    %p141 = scmp.eq.s32.totalorder %s15, 0
    %p142 = por %p140, %p141
    %p143 = scmp.ne.s32.totalorder %s135, %s137
    %p144 = scmp.eq.s32.totalorder %s20, 3
    %p145 = por %p143, %p144
    %p146 = scmp.ne.s32.totalorder %s137, %s138
    %p147 = scmp.eq.s32.totalorder %s20, 0
    %p148 = por %p146, %p147
    %p149 = scmp.ne.s32.totalorder %s137, %s138
    %p150 = scmp.eq.s32.totalorder %s21, 3
    %p151 = por %p149, %p150
    %p153 = scmp.ne.s32.totalorder %s138, %s152
    %p154 = scmp.eq.s32.totalorder %s21, 0
    %p155 = por %p153, %p154
    %s157 = sadd.s32 %s156, 1
    %p160 = scmp.eq.s32.totalorder %s15, 3
    %p161 = scmp.ne.s32.totalorder %s156, %s158
    %p162 = scmp.eq.s32.totalorder %s15, 0
    %p163 = por %p161, %p162
    %p164 = scmp.ne.s32.totalorder %s156, %s158
    %p165 = scmp.eq.s32.totalorder %s20, 3
    %p166 = por %p164, %p165
    %p167 = scmp.ne.s32.totalorder %s158, %s159
    %p168 = scmp.eq.s32.totalorder %s20, 0
    %p169 = por %p167, %p168
    %p170 = scmp.ne.s32.totalorder %s158, %s159
    %p171 = scmp.eq.s32.totalorder %s21, 3
    %p172 = por %p170, %p171
    %p174 = scmp.ne.s32.totalorder %s159, %s173
    %p175 = scmp.eq.s32.totalorder %s21, 0
    %p176 = por %p174, %p175
    %s178 = sadd.s32 %s177, 1
    %p181 = scmp.eq.s32.totalorder %s15, 3
    %p182 = scmp.ne.s32.totalorder %s177, %s179
    %p183 = scmp.eq.s32.totalorder %s15, 0
    %p184 = por %p182, %p183
    %p185 = scmp.ne.s32.totalorder %s177, %s179
    %p186 = scmp.eq.s32.totalorder %s20, 3
    %p187 = por %p185, %p186
    %p188 = scmp.ne.s32.totalorder %s179, %s180
    %p189 = scmp.eq.s32.totalorder %s20, 0
    %p190 = por %p188, %p189
    %p191 = scmp.ne.s32.totalorder %s179, %s180
    %p192 = scmp.eq.s32.totalorder %s21, 3
    %p193 = por %p191, %p192
    %p195 = scmp.ne.s32.totalorder %s180, %s194
    %p196 = scmp.eq.s32.totalorder %s21, 0
    %p197 = por %p195, %p196
    %s199 = sadd.s32 %s198, 1
    %p202 = scmp.eq.s32.totalorder %s15, 3
    %p203 = scmp.ne.s32.totalorder %s198, %s200
    %p204 = scmp.eq.s32.totalorder %s15, 0
    %p205 = por %p203, %p204
    %p206 = scmp.ne.s32.totalorder %s198, %s200
    %p207 = scmp.eq.s32.totalorder %s20, 3
    %p208 = por %p206, %p207
    %p209 = scmp.ne.s32.totalorder %s200, %s201
    %p210 = scmp.eq.s32.totalorder %s20, 0
    %p211 = por %p209, %p210
    %p212 = scmp.ne.s32.totalorder %s200, %s201
    %p213 = scmp.eq.s32.totalorder %s21, 3
    %p214 = por %p212, %p213
    %p216 = scmp.ne.s32.totalorder %s201, %s215
    %p217 = scmp.eq.s32.totalorder %s21, 0
    %p218 = por %p216, %p217
    %s220 = sadd.s32 %s219, 1
    %p223 = scmp.eq.s32.totalorder %s15, 3
    %p224 = scmp.ne.s32.totalorder %s219, %s221
    %p225 = scmp.eq.s32.totalorder %s15, 0
    %p226 = por %p224, %p225
    %p227 = scmp.ne.s32.totalorder %s219, %s221
    %p228 = scmp.eq.s32.totalorder %s20, 3
    %p229 = por %p227, %p228
    %p230 = scmp.ne.s32.totalorder %s221, %s222
    %p231 = scmp.eq.s32.totalorder %s20, 0
    %p232 = por %p230, %p231
    %p233 = scmp.ne.s32.totalorder %s221, %s222
    %p234 = scmp.eq.s32.totalorder %s21, 3
    %p235 = por %p233, %p234
    %p237 = scmp.ne.s32.totalorder %s222, %s236
    %p238 = scmp.eq.s32.totalorder %s21, 0
    %p239 = por %p237, %p238
    %s241 = sadd.s32 %s240, 1
    %p244 = scmp.eq.s32.totalorder %s15, 3
    %p245 = scmp.ne.s32.totalorder %s240, %s242
    %p246 = scmp.eq.s32.totalorder %s15, 0
    %p247 = por %p245, %p246
    %p248 = scmp.ne.s32.totalorder %s240, %s242
    %p249 = scmp.eq.s32.totalorder %s20, 3
    %p250 = por %p248, %p249
    %p251 = scmp.ne.s32.totalorder %s242, %s243
    %p252 = scmp.eq.s32.totalorder %s20, 0
    %p253 = por %p251, %p252
    %p254 = scmp.ne.s32.totalorder %s242, %s243
    %p255 = scmp.eq.s32.totalorder %s21, 3
    %p256 = por %p254, %p255
    %p258 = scmp.ne.s32.totalorder %s243, %s257
    %p259 = scmp.eq.s32.totalorder %s21, 0
    %p260 = por %p258, %p259
    %s261 = ssub.s32 %s22, %s34
    %s262 = ssub.s32 %s23, %s30
    %s263 = sor.u32 %s261, %s262
    %p264 = scmp.eq.s32.totalorder %s263, 0
    %s266 = sadd.s32 %s265, 1
    %s267 = scalar_select %p264, %s265, %s266
    %p270 = pneg %p264
    %p271 = scmp.eq.s32.totalorder %s15, 3
    %p272 = por %p270, %p271
    %p273 = scmp.ne.s32.totalorder %s265, %s268
    %p274 = scmp.eq.s32.totalorder %s15, 0
    %p275 = por %p273, %p274
    %p276 = scmp.ne.s32.totalorder %s265, %s268
    %p277 = scmp.eq.s32.totalorder %s20, 3
    %p278 = por %p276, %p277
    %p279 = scmp.ne.s32.totalorder %s268, %s269
    %p280 = scmp.eq.s32.totalorder %s20, 0
    %p281 = por %p279, %p280
    %p282 = scmp.ne.s32.totalorder %s268, %s269
    %p283 = scmp.eq.s32.totalorder %s21, 3
    %p284 = por %p282, %p283
    %p286 = scmp.ne.s32.totalorder %s269, %s285
    %p287 = scmp.eq.s32.totalorder %s21, 0
    %p288 = por %p286, %p287
    %p289 = scmp.le.s32.totalorder 1, %s15
    %p290 = scmp.lt.s32.totalorder %s15, 5
    %p291 = pnand %p289, %p290
    %p292 = pneg %p291
    // Predicated region
    $region9: #{basic_block_forward.1} parent=5 // pred_check
      _
    $region10: #{basic_block_forward.1} parent=5 // pred_check_branch
      %294 = sbr.rel (%p291) target = $region12
    $region11: #{basic_block_forward.1} parent=5 // pred_region
      %s295 = ssub.s32 %s15, 1
      // Predicated region
      $region13: #{basic_block_forward.1} parent=11 // pred_check
        %p296 = pneg %p148
      $region14: #{basic_block_forward.1} parent=11 // pred_check_branch
        %298 = sbr.rel (%p296) target = $region16
      $region15: #{basic_block_forward.1} parent=11 // pred_region
        _
      $region16: #{basic_block_forward.1} parent=11 // pred_fallthru
        _
      // Predicated region
      $region17: #{basic_block_forward.1} parent=11 // pred_check
        %p299 = pneg %p169
      $region18: #{basic_block_forward.1} parent=11 // pred_check_branch
        %301 = sbr.rel (%p299) target = $region20
      $region19: #{basic_block_forward.1} parent=11 // pred_region
        _
      $region20: #{basic_block_forward.1} parent=11 // pred_fallthru
        _
      // Predicated region
      $region21: #{basic_block_forward.1} parent=11 // pred_check
        %p302 = pneg %p190
      $region22: #{basic_block_forward.1} parent=11 // pred_check_branch
        %304 = sbr.rel (%p302) target = $region24
      $region23: #{basic_block_forward.1} parent=11 // pred_region
        _
      $region24: #{basic_block_forward.1} parent=11 // pred_fallthru
        _
      // Predicated region
      $region25: #{basic_block_forward.1} parent=11 // pred_check
        %p305 = pneg %p211
      $region26: #{basic_block_forward.1} parent=11 // pred_check_branch
        %307 = sbr.rel (%p305) target = $region28
      $region27: #{basic_block_forward.1} parent=11 // pred_region
        _
      $region28: #{basic_block_forward.1} parent=11 // pred_fallthru
        _
      // Predicated region
      $region29: #{basic_block_forward.1} parent=11 // pred_check
        %p308 = pneg %p232
      $region30: #{basic_block_forward.1} parent=11 // pred_check_branch
        %310 = sbr.rel (%p308) target = $region32
      $region31: #{basic_block_forward.1} parent=11 // pred_region
        _
      $region32: #{basic_block_forward.1} parent=11 // pred_fallthru
        _
      // Predicated region
      $region33: #{basic_block_forward.1} parent=11 // pred_check
        %p311 = pneg %p253
      $region34: #{basic_block_forward.1} parent=11 // pred_check_branch
        %313 = sbr.rel (%p311) target = $region36
      $region35: #{basic_block_forward.1} parent=11 // pred_region
        _
      $region36: #{basic_block_forward.1} parent=11 // pred_fallthru
        _
    $region12: #{basic_block_forward.1} parent=5 // pred_fallthru
      _
    %p314 = scmp.lt.s32.totalorder %s15, 4
    // Predicated region
    $region37: #{basic_block_forward.1} parent=5 // pred_check
      %p315 = pneg %p314
    $region38: #{basic_block_forward.1} parent=5 // pred_check_branch
      %317 = sbr.rel (%p315) target = $region40
    $region39: #{basic_block_forward.1} parent=5 // pred_region
      // Predicated region
      $region41: #{basic_block_forward.1} parent=39 // pred_check
        %p318 = pneg %p49
      $region42: #{basic_block_forward.1} parent=39 // pred_check_branch
        %320 = sbr.rel (%p318) target = $region44
      $region43: #{basic_block_forward.1} parent=39 // pred_region
        %s321 = smul.u32 8, %s23
        %p322 = scmp.lt.s32.totalorder %s22, 1
        %s323 = scalar_select %p322, %s22, 1
        %p324 = scmp.lt.s32.totalorder %s321, 15
        %s325 = scalar_select %p324, %s321, 15
        %s326 = smul.addr %s325, 2
        %s327 = smul.addr %s323, 32
        %s328 = sadd.s32 %s326, %s327
        %s329 = smul.addr %s328, 4
        %s330 = scalar_lea.vmem %s0, %s329
        %s331 = smul.u32 8, %s23
      $region44: #{basic_block_forward.1} parent=39 // pred_fallthru
        _
      // Predicated region
      $region45: #{basic_block_forward.1} parent=39 // pred_check
        %p332 = pneg %p85
      $region46: #{basic_block_forward.1} parent=39 // pred_check_branch
        %334 = sbr.rel (%p332) target = $region48
      $region47: #{basic_block_forward.1} parent=39 // pred_region
        %s335 = smul.u32 %s23, 4
        %s336 = ssub.s32 %s335, 1
        %p337 = scmp.gt.s32.totalorder %s336, 0
        %s338 = scalar_select %p337, %s336, 0
        %s339 = smul.u32 2, %s338
        %p340 = scmp.lt.s32.totalorder %s22, 1
        %s341 = scalar_select %p340, %s22, 1
        %p342 = scmp.lt.s32.totalorder %s339, 15
        %s343 = scalar_select %p342, %s339, 15
        %s344 = smul.addr %s343, 2
        %s345 = smul.addr %s341, 32
        %s346 = sadd.s32 %s344, %s345
        %s347 = smul.addr %s346, 4
        %s348 = scalar_lea.vmem %s1, %s347
        %s349 = smul.u32 %s23, 4
        %s350 = ssub.s32 %s349, 1
        %p351 = scmp.gt.s32.totalorder %s350, 0
        %s352 = scalar_select %p351, %s350, 0
        %s353 = smul.u32 2, %s352
      $region48: #{basic_block_forward.1} parent=39 // pred_fallthru
        _
      // Predicated region
      $region49: #{basic_block_forward.1} parent=39 // pred_check
        %p354 = pneg %p121
      $region50: #{basic_block_forward.1} parent=39 // pred_check_branch
        %356 = sbr.rel (%p354) target = $region52
      $region51: #{basic_block_forward.1} parent=39 // pred_region
        %s357 = sadd.s32 %s23, 1
        %s358 = smul.u32 %s357, 4
        %p359 = scmp.lt.s32.totalorder %s358, 7
        %s360 = scalar_select %p359, %s358, 7
        %s361 = smul.u32 2, %s360
        %p362 = scmp.lt.s32.totalorder %s22, 1
        %s363 = scalar_select %p362, %s22, 1
        %p364 = scmp.lt.s32.totalorder %s361, 15
        %s365 = scalar_select %p364, %s361, 15
        %s366 = smul.addr %s365, 2
        %s367 = smul.addr %s363, 32
        %s368 = sadd.s32 %s366, %s367
        %s369 = smul.addr %s368, 4
        %s370 = scalar_lea.vmem %s2, %s369
        %s371 = sadd.s32 %s23, 1
        %s372 = smul.u32 %s371, 4
        %p373 = scmp.lt.s32.totalorder %s372, 7
        %s374 = scalar_select %p373, %s372, 7
        %s375 = smul.u32 2, %s374
      $region52: #{basic_block_forward.1} parent=39 // pred_fallthru
        _
    $region40: #{basic_block_forward.1} parent=5 // pred_fallthru
      _
    %p376 = scmp.le.s32.totalorder 1, %s15
    %p377 = scmp.lt.s32.totalorder %s15, 5
    %p378 = pnand %p376, %p377
    %p379 = pneg %p378
    // Predicated region
    $region53: #{basic_block_forward.1} parent=5 // pred_check
      _
    $region54: #{basic_block_forward.1} parent=5 // pred_check_branch
      %381 = sbr.rel (%p378) target = $region56
    $region55: #{basic_block_forward.1} parent=5 // pred_region
      %s382 = ssub.s32 %s15, 1
      %s383 = smul.u32 8, %s25
      %p384 = scmp.lt.s32.totalorder %s24, 1
      %s385 = scalar_select %p384, %s24, 1
      %p386 = scmp.lt.s32.totalorder %s383, 15
      %s387 = scalar_select %p386, %s383, 15
      %s388 = smul.addr %s387, 2
      %s389 = smul.addr %s385, 32
      %s390 = sadd.s32 %s388, %s389
      %s391 = smul.addr %s390, 4
      %s392 = scalar_lea.vmem %s0, %s391
      %p393 = pneg %p55
      %p394 = pneg %p52
      %s395 = smul.u32 %s25, 4
      %s396 = ssub.s32 %s395, 1
      %p397 = scmp.gt.s32.totalorder %s396, 0
      %s398 = scalar_select %p397, %s396, 0
      %s399 = smul.u32 2, %s398
      %p400 = scmp.lt.s32.totalorder %s24, 1
      %s401 = scalar_select %p400, %s24, 1
      %p402 = scmp.lt.s32.totalorder %s399, 15
      %s403 = scalar_select %p402, %s399, 15
      %s404 = smul.addr %s403, 2
      %s405 = smul.addr %s401, 32
      %s406 = sadd.s32 %s404, %s405
      %s407 = smul.addr %s406, 4
      %s408 = scalar_lea.vmem %s1, %s407
      %p409 = pneg %p91
      %p410 = pneg %p88
      %s411 = sadd.s32 %s25, 1
      %s412 = smul.u32 %s411, 4
      %p413 = scmp.lt.s32.totalorder %s412, 7
      %s414 = scalar_select %p413, %s412, 7
      %s415 = smul.u32 2, %s414
      %p416 = scmp.lt.s32.totalorder %s24, 1
      %s417 = scalar_select %p416, %s24, 1
      %p418 = scmp.lt.s32.totalorder %s415, 15
      %s419 = scalar_select %p418, %s415, 15
      %s420 = smul.addr %s419, 2
      %s421 = smul.addr %s417, 32
      %s422 = sadd.s32 %s420, %s421
      %s423 = smul.addr %s422, 4
      %s424 = scalar_lea.vmem %s2, %s423
      %p425 = pneg %p127
      %p426 = pneg %p124
      %p427 = pneg %p148
      %p428 = pneg %p145
      %p429 = pneg %p169
      %p430 = pneg %p166
      %p431 = pneg %p190
      %p432 = pneg %p187
      %p433 = pneg %p211
      %p434 = pneg %p208
      %p435 = pneg %p232
      %p436 = pneg %p229
      %p437 = pneg %p253
      %p438 = pneg %p250
      %p439 = pneg %p281
      %p440 = pneg %p278
      %s441 = smul.u32 8, %s25
      %p442 = scmp.lt.s32.totalorder %s24, 1
      %s443 = scalar_select %p442, %s24, 1
      %p444 = scmp.lt.s32.totalorder %s441, 15
      %s445 = scalar_select %p444, %s441, 15
      %s446 = smul.addr %s445, 2
      %s447 = smul.addr %s443, 32
      %s448 = sadd.s32 %s446, %s447
      %s449 = smul.addr %s448, 4
      %s450 = scalar_lea.vmem %s9, %s449
      %s451 = smul.u32 8, %s25
      %p452 = scmp.lt.s32.totalorder %s24, 1
      %s453 = scalar_select %p452, %s24, 1
      %p454 = scmp.lt.s32.totalorder %s451, 15
      %s455 = scalar_select %p454, %s451, 15
      %s456 = smul.addr %s455, 2
      %s457 = smul.addr %s453, 32
      %s458 = sadd.s32 %s456, %s457
      %s459 = smul.addr %s458, 4
      %s460 = scalar_lea.vmem %s0, %s459
      %s461 = smul.u32 8, %s25
      %s462 = smul.u32 %s25, 4
      %s463 = ssub.s32 %s462, 1
      %p464 = scmp.gt.s32.totalorder %s463, 0
      %s465 = scalar_select %p464, %s463, 0
      %s466 = smul.u32 2, %s465
      %p467 = scmp.lt.s32.totalorder %s24, 1
      %s468 = scalar_select %p467, %s24, 1
      %p469 = scmp.lt.s32.totalorder %s466, 15
      %s470 = scalar_select %p469, %s466, 15
      %s471 = smul.addr %s470, 2
      %s472 = smul.addr %s468, 32
      %s473 = sadd.s32 %s471, %s472
      %s474 = smul.addr %s473, 4
      %s475 = scalar_lea.vmem %s1, %s474
      %s476 = smul.u32 %s25, 4
      %s477 = ssub.s32 %s476, 1
      %p478 = scmp.gt.s32.totalorder %s477, 0
      %s479 = scalar_select %p478, %s477, 0
      %s480 = smul.u32 2, %s479
      %s481 = sadd.s32 %s25, 1
      %s482 = smul.u32 %s481, 4
      %p483 = scmp.lt.s32.totalorder %s482, 7
      %s484 = scalar_select %p483, %s482, 7
      %s485 = smul.u32 2, %s484
      %p486 = scmp.lt.s32.totalorder %s24, 1
      %s487 = scalar_select %p486, %s24, 1
      %p488 = scmp.lt.s32.totalorder %s485, 15
      %s489 = scalar_select %p488, %s485, 15
      %s490 = smul.addr %s489, 2
      %s491 = smul.addr %s487, 32
      %s492 = sadd.s32 %s490, %s491
      %s493 = smul.addr %s492, 4
      %s494 = scalar_lea.vmem %s2, %s493
      %s495 = sadd.s32 %s25, 1
      %s496 = smul.u32 %s495, 4
      %p497 = scmp.lt.s32.totalorder %s496, 7
      %s498 = scalar_select %p497, %s496, 7
      %s499 = smul.u32 2, %s498
      %s500 = smul.u32 8, %s25
      %p501 = scmp.lt.s32.totalorder %s24, 1
      %s502 = scalar_select %p501, %s24, 1
      %p503 = scmp.lt.s32.totalorder %s500, 15
      %s504 = scalar_select %p503, %s500, 15
      %s505 = smul.addr %s504, 2
      %s506 = smul.addr %s502, 32
      %s507 = sadd.s32 %s505, %s506
      %s508 = smul.addr %s507, 4
      %s509 = scalar_lea.vmem %s9, %s508
      %s510 = smul.u32 8, %s25
      %v512 = vld [vmem:[%s475] sm:$0xf]
      %v513 = vld [vmem:[%s475 + $0x4] sm:$0xf]
      %v514 = vld [vmem:[%s475 + $0x8] sm:$0xf]
      %v515 = vld [vmem:[%s475 + $0xc] sm:$0xf]
      %p516 = scmp.gt.s32.totalorder %s25, 0
      %s517 = scalar_select %p516, 1.0, 0.0
      %p519 = scmp.ne.f32.partialorder %s517, %s517
      %s520 = sshrl.u32 %s517, 16
      %s521 = sand.u32 %s520, 1
      %s522 = sadd.s32 32767, %s521
      %s523 = sadd.s32 %s517, %s522
      %s524 = sand.u32 %s523, 4294901760
      %s525 = scalar_select %p519, 2143289344, %s524
      %s527 = sshrl.u32 %s525, 16
      %s528 = sshll.u32 %s527, 16
      %s529 = sor.u32 %s527, %s528
      %v530 = vstv %s529
      %v532 = vmul.bf16 %v512, %v530
      %v533 = vmul.bf16 %v513, %v530
      %v534 = vmul.bf16 %v514, %v530
      %v535 = vmul.bf16 %v515, %v530
      %v536 = vld [vmem:[%s494] sm:$0xf]
      %v537 = vld [vmem:[%s494 + $0x4] sm:$0xf]
      %v538 = vld [vmem:[%s494 + $0x8] sm:$0xf]
      %v539 = vld [vmem:[%s494 + $0xc] sm:$0xf]
      %p540 = scmp.lt.s32.totalorder %s25, 1
      %s541 = scalar_select %p540, 1.0, 0.0
      %p543 = scmp.ne.f32.partialorder %s541, %s541
      %s544 = sshrl.u32 %s541, 16
      %s545 = sand.u32 %s544, 1
      %s546 = sadd.s32 32767, %s545
      %s547 = sadd.s32 %s541, %s546
      %s548 = sand.u32 %s547, 4294901760
      %s549 = scalar_select %p543, 2143289344, %s548
      %s551 = sshrl.u32 %s549, 16
      %s552 = sshll.u32 %s551, 16
      %s553 = sor.u32 %s551, %s552
      %v554 = vstv %s553
      %v556 = vmul.bf16 %v536, %v554
      %v557 = vmul.bf16 %v537, %v554
      %v558 = vmul.bf16 %v538, %v554
      %v559 = vmul.bf16 %v539, %v554
      %v560 = vld [vmem:[%s460] sm:$0xf]
      %v561 = vld [vmem:[%s460 + $0x4] sm:$0xf]
      %v562 = vld [vmem:[%s460 + $0x8] sm:$0xf]
      %v563 = vld [vmem:[%s460 + $0xc] sm:$0xf]
      %v564 = vld [vmem:[%s460 + $0x10] sm:$0xf]
      %v565 = vld [vmem:[%s460 + $0x14] sm:$0xf]
      %v566 = vld [vmem:[%s460 + $0x18] sm:$0xf]
      %v567 = vld [vmem:[%s460 + $0x1c] sm:$0xf]
      %v568 = vld [vmem:[%s460 + $0x20] sm:$0xf]
      %v569 = vld [vmem:[%s460 + $0x24] sm:$0xf]
      %v570 = vld [vmem:[%s460 + $0x28] sm:$0xf]
      %v571 = vld [vmem:[%s460 + $0x2c] sm:$0xf]
      %v572 = vld [vmem:[%s460 + $0x30] sm:$0xf]
      %v573 = vld [vmem:[%s460 + $0x34] sm:$0xf]
      %v574 = vld [vmem:[%s460 + $0x38] sm:$0xf]
      %v575 = vld [vmem:[%s460 + $0x3c] sm:$0xf]
      %v600 = vunpack.c.l.b16 %v532
      %v601 = vunpack.c.l.b16 %v533
      %v602 = vunpack.c.l.b16 %v534
      %v603 = vunpack.c.l.b16 %v535
      %v604 = vunpack.c.l.b16 %v560
      %v605 = vunpack.c.l.b16 %v561
      %v606 = vunpack.c.l.b16 %v562
      %v607 = vunpack.c.l.b16 %v563
      %v608 = vunpack.c.l.b16 %v564
      %v609 = vunpack.c.l.b16 %v565
      %v610 = vunpack.c.l.b16 %v566
      %v611 = vunpack.c.l.b16 %v567
      %v612 = vunpack.c.l.b16 %v568
      %v613 = vunpack.c.l.b16 %v569
      %v614 = vunpack.c.l.b16 %v570
      %v615 = vunpack.c.l.b16 %v571
      %v616 = vunpack.c.l.b16 %v572
      %v617 = vunpack.c.l.b16 %v573
      %v618 = vunpack.c.l.b16 %v574
      %v619 = vunpack.c.l.b16 %v575
      %v620 = vunpack.c.l.b16 %v556
      %v621 = vunpack.c.l.b16 %v557
      %v622 = vunpack.c.l.b16 %v558
      %v623 = vunpack.c.l.b16 %v559
      %v624 = vpack.c.b16 %v601, %v600
      %v625 = vpack.c.b16 %v603, %v602
      %v626 = vpack.c.b16 %v605, %v604
      %v627 = vpack.c.b16 %v607, %v606
      %v628 = vpack.c.b16 %v609, %v608
      %v629 = vpack.c.b16 %v611, %v610
      %v630 = vpack.c.b16 %v613, %v612
      %v631 = vpack.c.b16 %v615, %v614
      %v632 = vpack.c.b16 %v617, %v616
      %v633 = vpack.c.b16 %v619, %v618
      %v634 = vpack.c.b16 %v621, %v620
      %v635 = vpack.c.b16 %v623, %v622
      %v637 = vshrl.u32 %v624, 16
      %v639 = vrot.slane %v637, 7
      %v640 = vshll.u32 %v624, 16
      %v642 = vor.u32 %v639, %v640
      %v644 = vshrl.u32 %v625, 16
      %v646 = vrot.slane %v644, 7
      %v647 = vshll.u32 %v625, 16
      %v649 = vor.u32 %v646, %v647
      %v651 = vshrl.u32 %v626, 16
      %v653 = vrot.slane %v651, 7
      %v654 = vshll.u32 %v626, 16
      %v656 = vor.u32 %v653, %v654
      %v658 = vshrl.u32 %v627, 16
      %v660 = vrot.slane %v658, 7
      %v661 = vshll.u32 %v627, 16
      %v663 = vor.u32 %v660, %v661
      %v665 = vshrl.u32 %v628, 16
      %v667 = vrot.slane %v665, 7
      %v668 = vshll.u32 %v628, 16
      %v670 = vor.u32 %v667, %v668
      %v672 = vshrl.u32 %v629, 16
      %v674 = vrot.slane %v672, 7
      %v675 = vshll.u32 %v629, 16
      %v677 = vor.u32 %v674, %v675
      %v679 = vshrl.u32 %v630, 16
      %v681 = vrot.slane %v679, 7
      %v682 = vshll.u32 %v630, 16
      %v684 = vor.u32 %v681, %v682
      %v686 = vshrl.u32 %v631, 16
      %v688 = vrot.slane %v686, 7
      %v689 = vshll.u32 %v631, 16
      %v691 = vor.u32 %v688, %v689
      %v693 = vshrl.u32 %v632, 16
      %v695 = vrot.slane %v693, 7
      %v696 = vshll.u32 %v632, 16
      %v698 = vor.u32 %v695, %v696
      %v700 = vshrl.u32 %v633, 16
      %v702 = vrot.slane %v700, 7
      %v703 = vshll.u32 %v633, 16
      %v705 = vor.u32 %v702, %v703
      %v707 = vshrl.u32 %v634, 16
      %v709 = vrot.slane %v707, 7
      %v710 = vshll.u32 %v634, 16
      %v712 = vor.u32 %v709, %v710
      %v714 = vshrl.u32 %v635, 16
      %v716 = vrot.slane %v714, 7
      %v717 = vshll.u32 %v635, 16
      %v719 = vor.u32 %v716, %v717
      %vm732 = vcmask 1040384
      %vm733 = vsmask.f32 256
      %vm734 = vmand %vm732, %vm733
      %v735 = vsel %vm734, 0, %v642
      %v736 = vsel %vm734, 0, %v649
      %v737 = vsel %vm734, 0, %v656
      %v738 = vsel %vm734, 0, %v663
      %v739 = vsel %vm734, 0, %v670
      %v740 = vsel %vm734, 0, %v677
      %v741 = vsel %vm734, 0, %v684
      %v742 = vsel %vm734, 0, %v691
      %v743 = vsel %vm734, 0, %v698
      %v744 = vsel %vm734, 0, %v705
      %v745 = vsel %vm734, 0, %v712
      %v746 = vsel %vm734, 0, %v719
      %v747 = vrot.slane %v640, 1
      %v748 = vor.u32 %v637, %v747
      %v749 = vrot.slane %v647, 1
      %v750 = vor.u32 %v644, %v749
      %v751 = vrot.slane %v654, 1
      %v752 = vor.u32 %v651, %v751
      %v753 = vrot.slane %v661, 1
      %v754 = vor.u32 %v658, %v753
      %v755 = vrot.slane %v668, 1
      %v756 = vor.u32 %v665, %v755
      %v757 = vrot.slane %v675, 1
      %v758 = vor.u32 %v672, %v757
      %v759 = vrot.slane %v682, 1
      %v760 = vor.u32 %v679, %v759
      %v761 = vrot.slane %v689, 1
      %v762 = vor.u32 %v686, %v761
      %v763 = vrot.slane %v696, 1
      %v764 = vor.u32 %v693, %v763
      %v765 = vrot.slane %v703, 1
      %v766 = vor.u32 %v700, %v765
      %v767 = vrot.slane %v710, 1
      %v768 = vor.u32 %v707, %v767
      %v769 = vrot.slane %v717, 1
      %v770 = vor.u32 %v714, %v769
      %vm783 = vcmask 1047552
      %vm784 = vsmask.f32 7424
      %vm785 = vmand %vm783, %vm784
      %v786 = vsel %vm785, %v748, 0
      %v787 = vsel %vm785, %v750, 0
      %v788 = vsel %vm785, %v752, 0
      %v789 = vsel %vm785, %v754, 0
      %v790 = vsel %vm785, %v756, 0
      %v791 = vsel %vm785, %v758, 0
      %v792 = vsel %vm785, %v760, 0
      %v793 = vsel %vm785, %v762, 0
      %v794 = vsel %vm785, %v764, 0
      %v795 = vsel %vm785, %v766, 0
      %v796 = vsel %vm785, %v768, 0
      %v797 = vsel %vm785, %v770, 0
      %798 = vrot.lane.b32.xlu0 %v624, 64
      %v799 = vpop.permute.xlu0 %798
      %800 = vrot.lane.b32.xlu0 %v625, 64
      %v801 = vpop.permute.xlu0 %800
      %802 = vrot.lane.b32.xlu0 %v626, 64
      %v803 = vpop.permute.xlu0 %802
      %804 = vrot.lane.b32.xlu0 %v627, 64
      %v805 = vpop.permute.xlu0 %804
      %806 = vrot.lane.b32.xlu0 %v628, 64
      %v807 = vpop.permute.xlu0 %806
      %808 = vrot.lane.b32.xlu0 %v629, 64
      %v809 = vpop.permute.xlu0 %808
      %810 = vrot.lane.b32.xlu0 %v630, 64
      %v811 = vpop.permute.xlu0 %810
      %812 = vrot.lane.b32.xlu0 %v631, 64
      %v813 = vpop.permute.xlu0 %812
      %814 = vrot.lane.b32.xlu0 %v632, 64
      %v815 = vpop.permute.xlu0 %814
      %816 = vrot.lane.b32.xlu0 %v633, 64
      %v817 = vpop.permute.xlu0 %816
      %818 = vrot.lane.b32.xlu0 %v634, 64
      %v819 = vpop.permute.xlu0 %818
      %820 = vrot.lane.b32.xlu0 %v635, 64
      %v821 = vpop.permute.xlu0 %820
      %vm822 = vcmask 523264
      %v825 = vsel %vm822, %v735, %v799
      %v829 = vsel %vm822, %v736, %v801
      %v833 = vsel %vm822, %v737, %v803
      %v837 = vsel %vm822, %v738, %v805
      %v841 = vsel %vm822, %v739, %v807
      %v845 = vsel %vm822, %v740, %v809
      %v849 = vsel %vm822, %v741, %v811
      %v853 = vsel %vm822, %v742, %v813
      %v857 = vsel %vm822, %v743, %v815
      %v861 = vsel %vm822, %v744, %v817
      %v865 = vsel %vm822, %v745, %v819
      %v869 = vsel %vm822, %v746, %v821
      %v871 = vld [vmem:[%s3] sm:$0xf]
      %v872 = vld [vmem:[%s3 + $0x4] sm:$0xf]
      %v873 = vld [vmem:[%s3 + $0x8] sm:$0xf]
      %v874 = vld [vmem:[%s3 + $0xc] sm:$0xf]
      %v875 = vld [vmem:[%s3 + $0x10] sm:$0xf]
      %v876 = vld [vmem:[%s3 + $0x14] sm:$0xf]
      %v877 = vld [vmem:[%s3 + $0x18] sm:$0xf]
      %v878 = vld [vmem:[%s3 + $0x1c] sm:$0xf]
      %v879 = vld [vmem:[%s3 + $0x20] sm:$0xf]
      %v880 = vld [vmem:[%s3 + $0x24] sm:$0xf]
      %v881 = vld [vmem:[%s3 + $0x28] sm:$0xf]
      %v882 = vld [vmem:[%s3 + $0x2c] sm:$0xf]
      %v883 = vld [vmem:[%s3 + $0x30] sm:$0xf]
      %v884 = vld [vmem:[%s3 + $0x34] sm:$0xf]
      %v885 = vld [vmem:[%s3 + $0x38] sm:$0xf]
      %v886 = vld [vmem:[%s3 + $0x3c] sm:$0xf]
      %v887 = vld [vmem:[%s3 + $0x40] sm:$0xf]
      %v888 = vld [vmem:[%s3 + $0x44] sm:$0xf]
      %v889 = vld [vmem:[%s3 + $0x48] sm:$0xf]
      %v890 = vld [vmem:[%s3 + $0x4c] sm:$0xf]
      %v891 = vld [vmem:[%s3 + $0x50] sm:$0xf]
      %v892 = vld [vmem:[%s3 + $0x54] sm:$0xf]
      %v893 = vld [vmem:[%s3 + $0x58] sm:$0xf]
      %v894 = vld [vmem:[%s3 + $0x5c] sm:$0xf]
      %s895 = scalar_lea.vmem %s3, 96
      %v896 = vld [vmem:[%s895] sm:$0xf]
      %v897 = vld [vmem:[%s895 + $0x4] sm:$0xf]
      %v898 = vld [vmem:[%s895 + $0x8] sm:$0xf]
      %v899 = vld [vmem:[%s895 + $0xc] sm:$0xf]
      %v900 = vld [vmem:[%s895 + $0x10] sm:$0xf]
      %v901 = vld [vmem:[%s895 + $0x14] sm:$0xf]
      %v902 = vld [vmem:[%s895 + $0x18] sm:$0xf]
      %v903 = vld [vmem:[%s895 + $0x1c] sm:$0xf]
      %v904 = vld [vmem:[%s895 + $0x20] sm:$0xf]
      %v905 = vld [vmem:[%s895 + $0x24] sm:$0xf]
      %v906 = vld [vmem:[%s895 + $0x28] sm:$0xf]
      %v907 = vld [vmem:[%s895 + $0x2c] sm:$0xf]
      %v908 = vld [vmem:[%s895 + $0x30] sm:$0xf]
      %v909 = vld [vmem:[%s895 + $0x34] sm:$0xf]
      %v910 = vld [vmem:[%s895 + $0x38] sm:$0xf]
      %v911 = vld [vmem:[%s895 + $0x3c] sm:$0xf]
      %v912 = vld [vmem:[%s895 + $0x40] sm:$0xf]
      %v913 = vld [vmem:[%s895 + $0x44] sm:$0xf]
      %v914 = vld [vmem:[%s895 + $0x48] sm:$0xf]
      %v915 = vld [vmem:[%s895 + $0x4c] sm:$0xf]
      %v916 = vld [vmem:[%s895 + $0x50] sm:$0xf]
      %v917 = vld [vmem:[%s895 + $0x54] sm:$0xf]
      %v918 = vld [vmem:[%s895 + $0x58] sm:$0xf]
      %v919 = vld [vmem:[%s895 + $0x5c] sm:$0xf]
      %v944 = vunpack.c.l.b16 %v896
      %v945 = vunpack.c.l.b16 %v897
      %v946 = vunpack.c.l.b16 %v898
      %v947 = vunpack.c.l.b16 %v899
      %v948 = vunpack.c.l.b16 %v900
      %v949 = vunpack.c.l.b16 %v901
      %v950 = vunpack.c.l.b16 %v902
      %v951 = vunpack.c.l.b16 %v903
      %v952 = vunpack.c.l.b16 %v904
      %v953 = vunpack.c.l.b16 %v905
      %v954 = vunpack.c.l.b16 %v906
      %v955 = vunpack.c.l.b16 %v907
      %v956 = vunpack.c.l.b16 %v908
      %v957 = vunpack.c.l.b16 %v909
      %v958 = vunpack.c.l.b16 %v910
      %v959 = vunpack.c.l.b16 %v911
      %v960 = vunpack.c.l.b16 %v912
      %v961 = vunpack.c.l.b16 %v913
      %v962 = vunpack.c.l.b16 %v914
      %v963 = vunpack.c.l.b16 %v915
      %v964 = vunpack.c.l.b16 %v916
      %v965 = vunpack.c.l.b16 %v917
      %v966 = vunpack.c.l.b16 %v918
      %v967 = vunpack.c.l.b16 %v919
      %v968 = vpack.c.b16 %v945, %v944
      %v969 = vpack.c.b16 %v947, %v946
      %v970 = vpack.c.b16 %v949, %v948
      %v971 = vpack.c.b16 %v951, %v950
      %v972 = vpack.c.b16 %v953, %v952
      %v973 = vpack.c.b16 %v955, %v954
      %v974 = vpack.c.b16 %v957, %v956
      %v975 = vpack.c.b16 %v959, %v958
      %v976 = vpack.c.b16 %v961, %v960
      %v977 = vpack.c.b16 %v963, %v962
      %v978 = vpack.c.b16 %v965, %v964
      %v979 = vpack.c.b16 %v967, %v966
      %v993 = vsel %vm822, %v787, 0
      %v996 = vsel %vm822, %v788, 0
      %v999 = vsel %vm822, %v789, 0
      %v1002 = vsel %vm822, %v790, 0
      %v1005 = vsel %vm822, %v791, 0
      %v1008 = vsel %vm822, %v792, 0
      %v1011 = vsel %vm822, %v793, 0
      %v1014 = vsel %vm822, %v794, 0
      %v1017 = vsel %vm822, %v795, 0
      %v1020 = vsel %vm822, %v796, 0
      %1022 = vmatprep.subr.bf16.mxu0 0
      %1023 = vmatpush1.bf16.msra.mxu0 %v968
      %1024 = vmatprep.subr.bf16.mxu0 0
      %1025 = vmatpush1.bf16.msra.mxu0 %v969
      %1026 = vmatprep.subr.bf16.mxu0 0
      %1027 = vmatpush1.bf16.msra.mxu0 %v970
      %1028 = vmatprep.subr.bf16.mxu0 0
      %1029 = vmatpush1.bf16.msra.mxu0 %v971
      %1030 = vmatprep.subr.bf16.mxu0 0
      %1031 = vmatpush1.bf16.msra.mxu0 %v972
      %1032 = vmatprep.subr.bf16.mxu0 0
      %1033 = vmatpush1.bf16.msra.mxu0 %v973
      %1034 = vmatprep.subr.bf16.mxu0 0
      %1035 = vmatpush1.bf16.msra.mxu0 %v974
      %1036 = vmatprep.subr.bf16.mxu0 0
      %1037 = vmatpush1.bf16.msra.mxu0 %v975
      %1038 = vmatprep.subr.bf16.mxu0 0
      %1039 = vmatpush1.bf16.msra.mxu0 %v976
      %1040 = vmatprep.subr.bf16.mxu0 0
      %1041 = vmatpush1.bf16.msra.mxu0 %v977
      %1042 = vmatprep.subr.bf16.mxu0 0
      %1043 = vmatpush1.bf16.msra.mxu0 %v978
      %1044 = vmatprep.subr.bf16.mxu0 0
      %1045 = vmatpush1.bf16.msra.mxu0 %v979
      %1046 = vmatprep.subr.bf16.mxu0 0
      %1047 = vmatpush1.bf16.msra.mxu0 0
      %1048 = vmatprep.subr.bf16.mxu0 0
      %1049 = vmatpush1.bf16.msra.mxu0 0
      %1050 = vmatprep.subr.bf16.mxu0 0
      %1051 = vmatpush1.bf16.msra.mxu0 0
      %1052 = vmatprep.subr.bf16.mxu0 0
      %1053 = vmatpush1.bf16.msra.mxu0 0
      %1054 = vmatprep.mubr.bf16.mxu0 %v993
      %1055 = vmatmul.mubr.bf16.gmra.mrb[0].mxu0 %v829
      %v1056 = vpop.f32.mrb[0].mxu0
      %v1057 = vadd.f32 0.0, %v1056
      %v1058 = vpop.f32.mrb[0].mxu0
      %v1059 = vpop.f32.mrb[0].mxu0
      %v1060 = vadd.f32 0.0, %v1059
      %v1061 = vpop.f32.mrb[0].mxu0
      %1062 = vmatprep.mubr.bf16.mxu0 %v996
      %1063 = vmatmul.mubr.bf16.gmra.mrb[0].mxu0 %v833
      %v1064 = vpop.f32.mrb[0].mxu0
      %v1065 = vadd.f32 0.0, %v1064
      %v1066 = vpop.f32.mrb[0].mxu0
      %v1067 = vpop.f32.mrb[0].mxu0
      %v1068 = vadd.f32 0.0, %v1067
      %v1069 = vpop.f32.mrb[0].mxu0
      %1070 = vmatprep.mubr.bf16.mxu0 %v999
      %1071 = vmatmul.mubr.bf16.gmra.mrb[0].mxu0 %v837
      %v1072 = vpop.f32.mrb[0].mxu0
      %v1073 = vadd.f32 0.0, %v1072
      %v1074 = vpop.f32.mrb[0].mxu0
      %v1075 = vpop.f32.mrb[0].mxu0
      %v1076 = vadd.f32 0.0, %v1075
      %v1077 = vpop.f32.mrb[0].mxu0
      %1078 = vmatprep.mubr.bf16.mxu0 %v1002
      %1079 = vmatmul.mubr.bf16.gmra.mrb[0].mxu0 %v841
      %v1080 = vpop.f32.mrb[0].mxu0
      %v1081 = vadd.f32 0.0, %v1080
      %v1082 = vpop.f32.mrb[0].mxu0
      %v1083 = vpop.f32.mrb[0].mxu0
      %v1084 = vadd.f32 0.0, %v1083
      %v1085 = vpop.f32.mrb[0].mxu0
      %1086 = vmatprep.mubr.bf16.mxu0 %v1005
      %1087 = vmatmul.mubr.bf16.gmra.mrb[0].mxu0 %v845
      %v1088 = vpop.f32.mrb[0].mxu0
      %v1089 = vadd.f32 0.0, %v1088
      %v1090 = vpop.f32.mrb[0].mxu0
      %v1091 = vpop.f32.mrb[0].mxu0
      %v1092 = vadd.f32 0.0, %v1091
      %v1093 = vpop.f32.mrb[0].mxu0
      %1094 = vmatprep.mubr.bf16.mxu0 %v1008
      %1095 = vmatmul.mubr.bf16.gmra.mrb[0].mxu0 %v849
      %v1096 = vpop.f32.mrb[0].mxu0
      %v1097 = vadd.f32 0.0, %v1096
      %v1098 = vpop.f32.mrb[0].mxu0
      %v1099 = vpop.f32.mrb[0].mxu0
      %v1100 = vadd.f32 0.0, %v1099
      %v1101 = vpop.f32.mrb[0].mxu0
      %1102 = vmatprep.mubr.bf16.mxu0 %v1011
      %1103 = vmatmul.mubr.bf16.gmra.mrb[0].mxu0 %v853
      %v1104 = vpop.f32.mrb[0].mxu0
      %v1105 = vadd.f32 0.0, %v1104
      %v1106 = vpop.f32.mrb[0].mxu0
      %v1107 = vpop.f32.mrb[0].mxu0
      %v1108 = vadd.f32 0.0, %v1107
      %v1109 = vpop.f32.mrb[0].mxu0
      %1110 = vmatprep.mubr.bf16.mxu0 %v1014
      %1111 = vmatmul.mubr.bf16.gmra.mrb[0].mxu0 %v857
      %v1112 = vpop.f32.mrb[0].mxu0
      %v1113 = vadd.f32 0.0, %v1112
      %v1114 = vpop.f32.mrb[0].mxu0
      %v1115 = vpop.f32.mrb[0].mxu0
      %v1116 = vadd.f32 0.0, %v1115
      %v1117 = vpop.f32.mrb[0].mxu0
      %1118 = vmatprep.mubr.bf16.mxu0 %v1017
      %1119 = vmatmul.mubr.bf16.gmra.mrb[0].mxu0 %v861
      %v1120 = vpop.f32.mrb[0].mxu0
      %v1121 = vadd.f32 0.0, %v1120
      %v1122 = vpop.f32.mrb[0].mxu0
      %v1123 = vpop.f32.mrb[0].mxu0
      %v1124 = vadd.f32 0.0, %v1123
      %v1125 = vpop.f32.mrb[0].mxu0
      %1126 = vmatprep.mubr.bf16.mxu0 %v1020
      %1127 = vmatmul.mubr.bf16.gmra.mrb[0].mxu0 %v865
      %v1128 = vpop.f32.mrb[0].mxu0
      %v1129 = vadd.f32 0.0, %v1128
      %v1130 = vpop.f32.mrb[0].mxu0
      %v1131 = vpop.f32.mrb[0].mxu0
      %v1132 = vadd.f32 0.0, %v1131
      %v1133 = vpop.f32.mrb[0].mxu0
      %1134 = vdwg.mxu0
      %v1159 = vunpack.c.l.b16 %v871
      %v1160 = vunpack.c.l.b16 %v872
      %v1161 = vunpack.c.l.b16 %v873
      %v1162 = vunpack.c.l.b16 %v874
      %v1163 = vunpack.c.l.b16 %v875
      %v1164 = vunpack.c.l.b16 %v876
      %v1165 = vunpack.c.l.b16 %v877
      %v1166 = vunpack.c.l.b16 %v878
      %v1167 = vunpack.c.l.b16 %v879
      %v1168 = vunpack.c.l.b16 %v880
      %v1169 = vunpack.c.l.b16 %v881
      %v1170 = vunpack.c.l.b16 %v882
      %v1171 = vunpack.c.l.b16 %v883
      %v1172 = vunpack.c.l.b16 %v884
      %v1173 = vunpack.c.l.b16 %v885
      %v1174 = vunpack.c.l.b16 %v886
      %v1175 = vunpack.c.l.b16 %v887
      %v1176 = vunpack.c.l.b16 %v888
      %v1177 = vunpack.c.l.b16 %v889
      %v1178 = vunpack.c.l.b16 %v890
      %v1179 = vunpack.c.l.b16 %v891
      %v1180 = vunpack.c.l.b16 %v892
      %v1181 = vunpack.c.l.b16 %v893
      %v1182 = vunpack.c.l.b16 %v894
      %v1183 = vpack.c.b16 %v1160, %v1159
      %v1184 = vpack.c.b16 %v1162, %v1161
      %v1185 = vpack.c.b16 %v1164, %v1163
      %v1186 = vpack.c.b16 %v1166, %v1165
      %v1187 = vpack.c.b16 %v1168, %v1167
      %v1188 = vpack.c.b16 %v1170, %v1169
      %v1189 = vpack.c.b16 %v1172, %v1171
      %v1190 = vpack.c.b16 %v1174, %v1173
      %v1191 = vpack.c.b16 %v1176, %v1175
      %v1192 = vpack.c.b16 %v1178, %v1177
      %v1193 = vpack.c.b16 %v1180, %v1179
      %v1194 = vpack.c.b16 %v1182, %v1181
      %v1208 = vsel %vm822, %v786, 0
      %1210 = vmatprep.subr.bf16.mxu0 0
      %1211 = vmatpush1.bf16.msra.mxu0 %v1183
      %1212 = vmatprep.subr.bf16.mxu0 0
      %1213 = vmatpush1.bf16.msra.mxu0 %v1184
      %1214 = vmatprep.subr.bf16.mxu0 0
      %1215 = vmatpush1.bf16.msra.mxu0 %v1185
      %1216 = vmatprep.subr.bf16.mxu0 0
      %1217 = vmatpush1.bf16.msra.mxu0 %v1186
      %1218 = vmatprep.subr.bf16.mxu0 0
      %1219 = vmatpush1.bf16.msra.mxu0 %v1187
      %1220 = vmatprep.subr.bf16.mxu0 0
      %1221 = vmatpush1.bf16.msra.mxu0 %v1188
      %1222 = vmatprep.subr.bf16.mxu0 0
      %1223 = vmatpush1.bf16.msra.mxu0 %v1189
      %1224 = vmatprep.subr.bf16.mxu0 0
      %1225 = vmatpush1.bf16.msra.mxu0 %v1190
      %1226 = vmatprep.subr.bf16.mxu0 0
      %1227 = vmatpush1.bf16.msra.mxu0 %v1191
      %1228 = vmatprep.subr.bf16.mxu0 0
      %1229 = vmatpush1.bf16.msra.mxu0 %v1192
      %1230 = vmatprep.subr.bf16.mxu0 0
      %1231 = vmatpush1.bf16.msra.mxu0 %v1193
      %1232 = vmatprep.subr.bf16.mxu0 0
      %1233 = vmatpush1.bf16.msra.mxu0 %v1194
      %1234 = vmatprep.subr.bf16.mxu0 0
      %1235 = vmatpush1.bf16.msra.mxu0 0
      %1236 = vmatprep.subr.bf16.mxu0 0
      %1237 = vmatpush1.bf16.msra.mxu0 0
      %1238 = vmatprep.subr.bf16.mxu0 0
      %1239 = vmatpush1.bf16.msra.mxu0 0
      %1240 = vmatprep.subr.bf16.mxu0 0
      %1241 = vmatpush1.bf16.msra.mxu0 0
      %1242 = vmatprep.mubr.bf16.mxu0 %v1208
      %1243 = vmatmul.mubr.bf16.gmra.mrb[0].mxu0 %v825
      %v1244 = vpop.f32.mrb[0].mxu0
      %v1245 = vadd.f32 %v1057, %v1244
      %v1246 = vpop.f32.mrb[0].mxu0
      %v1247 = vpop.f32.mrb[0].mxu0
      %v1248 = vadd.f32 %v1060, %v1247
      %v1249 = vpop.f32.mrb[0].mxu0
      %1250 = vmatprep.mubr.bf16.mxu0 %v993
      %1251 = vmatmul.mubr.bf16.gmra.mrb[0].mxu0 %v829
      %v1252 = vpop.f32.mrb[0].mxu0
      %v1253 = vadd.f32 %v1065, %v1252
      %v1254 = vpop.f32.mrb[0].mxu0
      %v1255 = vpop.f32.mrb[0].mxu0
      %v1256 = vadd.f32 %v1068, %v1255
      %v1257 = vpop.f32.mrb[0].mxu0
      %1258 = vmatprep.mubr.bf16.mxu0 %v996
      %1259 = vmatmul.mubr.bf16.gmra.mrb[0].mxu0 %v833
      %v1260 = vpop.f32.mrb[0].mxu0
      %v1261 = vadd.f32 %v1073, %v1260
      %v1262 = vpop.f32.mrb[0].mxu0
      %v1263 = vpop.f32.mrb[0].mxu0
      %v1264 = vadd.f32 %v1076, %v1263
      %v1265 = vpop.f32.mrb[0].mxu0
      %1266 = vmatprep.mubr.bf16.mxu0 %v999
      %1267 = vmatmul.mubr.bf16.gmra.mrb[0].mxu0 %v837
      %v1268 = vpop.f32.mrb[0].mxu0
      %v1269 = vadd.f32 %v1081, %v1268
      %v1270 = vpop.f32.mrb[0].mxu0
      %v1271 = vpop.f32.mrb[0].mxu0
      %v1272 = vadd.f32 %v1084, %v1271
      %v1273 = vpop.f32.mrb[0].mxu0
      %1274 = vmatprep.mubr.bf16.mxu0 %v1002
      %1275 = vmatmul.mubr.bf16.gmra.mrb[0].mxu0 %v841
      %v1276 = vpop.f32.mrb[0].mxu0
      %v1277 = vadd.f32 %v1089, %v1276
      %v1278 = vpop.f32.mrb[0].mxu0
      %v1279 = vpop.f32.mrb[0].mxu0
      %v1280 = vadd.f32 %v1092, %v1279
      %v1281 = vpop.f32.mrb[0].mxu0
      %1282 = vmatprep.mubr.bf16.mxu0 %v1005
      %1283 = vmatmul.mubr.bf16.gmra.mrb[0].mxu0 %v845
      %v1284 = vpop.f32.mrb[0].mxu0
      %v1285 = vadd.f32 %v1097, %v1284
      %v1286 = vpop.f32.mrb[0].mxu0
      %v1287 = vpop.f32.mrb[0].mxu0
      %v1288 = vadd.f32 %v1100, %v1287
      %v1289 = vpop.f32.mrb[0].mxu0
      %1290 = vmatprep.mubr.bf16.mxu0 %v1008
      %1291 = vmatmul.mubr.bf16.gmra.mrb[0].mxu0 %v849
      %v1292 = vpop.f32.mrb[0].mxu0
      %v1293 = vadd.f32 %v1105, %v1292
      %v1294 = vpop.f32.mrb[0].mxu0
      %v1295 = vpop.f32.mrb[0].mxu0
      %v1296 = vadd.f32 %v1108, %v1295
      %v1297 = vpop.f32.mrb[0].mxu0
      %1298 = vmatprep.mubr.bf16.mxu0 %v1011
      %1299 = vmatmul.mubr.bf16.gmra.mrb[0].mxu0 %v853
      %v1300 = vpop.f32.mrb[0].mxu0
      %v1301 = vadd.f32 %v1113, %v1300
      %v1302 = vpop.f32.mrb[0].mxu0
      %v1303 = vpop.f32.mrb[0].mxu0
      %v1304 = vadd.f32 %v1116, %v1303
      %v1305 = vpop.f32.mrb[0].mxu0
      %1306 = vmatprep.mubr.bf16.mxu0 %v1014
      %1307 = vmatmul.mubr.bf16.gmra.mrb[0].mxu0 %v857
      %v1308 = vpop.f32.mrb[0].mxu0
      %v1309 = vadd.f32 %v1121, %v1308
      %v1310 = vpop.f32.mrb[0].mxu0
      %v1311 = vpop.f32.mrb[0].mxu0
      %v1312 = vadd.f32 %v1124, %v1311
      %v1313 = vpop.f32.mrb[0].mxu0
      %1314 = vmatprep.mubr.bf16.mxu0 %v1017
      %1315 = vmatmul.mubr.bf16.gmra.mrb[0].mxu0 %v861
      %v1316 = vpop.f32.mrb[0].mxu0
      %v1317 = vadd.f32 %v1129, %v1316
      %v1318 = vpop.f32.mrb[0].mxu0
      %v1319 = vpop.f32.mrb[0].mxu0
      %v1320 = vadd.f32 %v1132, %v1319
      %v1321 = vpop.f32.mrb[0].mxu0
      %1322 = vdwg.mxu0
      %s1323 = scalar_lea.vmem %s3, 192
      %v1324 = vld [vmem:[%s1323] sm:$0xf]
      %v1325 = vld [vmem:[%s1323 + $0x4] sm:$0xf]
      %v1326 = vld [vmem:[%s1323 + $0x8] sm:$0xf]
      %v1327 = vld [vmem:[%s1323 + $0xc] sm:$0xf]
      %v1328 = vld [vmem:[%s1323 + $0x10] sm:$0xf]
      %v1329 = vld [vmem:[%s1323 + $0x14] sm:$0xf]
      %v1330 = vld [vmem:[%s1323 + $0x18] sm:$0xf]
      %v1331 = vld [vmem:[%s1323 + $0x1c] sm:$0xf]
      %v1332 = vld [vmem:[%s1323 + $0x20] sm:$0xf]
      %v1333 = vld [vmem:[%s1323 + $0x24] sm:$0xf]
      %v1334 = vld [vmem:[%s1323 + $0x28] sm:$0xf]
      %v1335 = vld [vmem:[%s1323 + $0x2c] sm:$0xf]
      %v1336 = vld [vmem:[%s1323 + $0x30] sm:$0xf]
      %v1337 = vld [vmem:[%s1323 + $0x34] sm:$0xf]
      %v1338 = vld [vmem:[%s1323 + $0x38] sm:$0xf]
      %v1339 = vld [vmem:[%s1323 + $0x3c] sm:$0xf]
      %v1340 = vld [vmem:[%s1323 + $0x40] sm:$0xf]
      %v1341 = vld [vmem:[%s1323 + $0x44] sm:$0xf]
      %v1342 = vld [vmem:[%s1323 + $0x48] sm:$0xf]
      %v1343 = vld [vmem:[%s1323 + $0x4c] sm:$0xf]
      %v1344 = vld [vmem:[%s1323 + $0x50] sm:$0xf]
      %v1345 = vld [vmem:[%s1323 + $0x54] sm:$0xf]
      %v1346 = vld [vmem:[%s1323 + $0x58] sm:$0xf]
      %v1347 = vld [vmem:[%s1323 + $0x5c] sm:$0xf]
      %v1372 = vunpack.c.l.b16 %v1324
      %v1373 = vunpack.c.l.b16 %v1325
      %v1374 = vunpack.c.l.b16 %v1326
      %v1375 = vunpack.c.l.b16 %v1327
      %v1376 = vunpack.c.l.b16 %v1328
      %v1377 = vunpack.c.l.b16 %v1329
      %v1378 = vunpack.c.l.b16 %v1330
      %v1379 = vunpack.c.l.b16 %v1331
      %v1380 = vunpack.c.l.b16 %v1332
      %v1381 = vunpack.c.l.b16 %v1333
      %v1382 = vunpack.c.l.b16 %v1334
      %v1383 = vunpack.c.l.b16 %v1335
      %v1384 = vunpack.c.l.b16 %v1336
      %v1385 = vunpack.c.l.b16 %v1337
      %v1386 = vunpack.c.l.b16 %v1338
      %v1387 = vunpack.c.l.b16 %v1339
      %v1388 = vunpack.c.l.b16 %v1340
      %v1389 = vunpack.c.l.b16 %v1341
      %v1390 = vunpack.c.l.b16 %v1342
      %v1391 = vunpack.c.l.b16 %v1343
      %v1392 = vunpack.c.l.b16 %v1344
      %v1393 = vunpack.c.l.b16 %v1345
      %v1394 = vunpack.c.l.b16 %v1346
      %v1395 = vunpack.c.l.b16 %v1347
      %v1396 = vpack.c.b16 %v1373, %v1372
      %v1397 = vpack.c.b16 %v1375, %v1374
      %v1398 = vpack.c.b16 %v1377, %v1376
      %v1399 = vpack.c.b16 %v1379, %v1378
      %v1400 = vpack.c.b16 %v1381, %v1380
      %v1401 = vpack.c.b16 %v1383, %v1382
      %v1402 = vpack.c.b16 %v1385, %v1384
      %v1403 = vpack.c.b16 %v1387, %v1386
      %v1404 = vpack.c.b16 %v1389, %v1388
      %v1405 = vpack.c.b16 %v1391, %v1390
      %v1406 = vpack.c.b16 %v1393, %v1392
      %v1407 = vpack.c.b16 %v1395, %v1394
      %v1421 = vsel %vm822, %v797, 0
      %1423 = vmatprep.subr.bf16.mxu0 0
      %1424 = vmatpush1.bf16.msra.mxu0 %v1396
      %1425 = vmatprep.subr.bf16.mxu0 0
      %1426 = vmatpush1.bf16.msra.mxu0 %v1397
      %1427 = vmatprep.subr.bf16.mxu0 0
      %1428 = vmatpush1.bf16.msra.mxu0 %v1398
      %1429 = vmatprep.subr.bf16.mxu0 0
      %1430 = vmatpush1.bf16.msra.mxu0 %v1399
      %1431 = vmatprep.subr.bf16.mxu0 0
      %1432 = vmatpush1.bf16.msra.mxu0 %v1400
      %1433 = vmatprep.subr.bf16.mxu0 0
      %1434 = vmatpush1.bf16.msra.mxu0 %v1401
      %1435 = vmatprep.subr.bf16.mxu0 0
      %1436 = vmatpush1.bf16.msra.mxu0 %v1402
      %1437 = vmatprep.subr.bf16.mxu0 0
      %1438 = vmatpush1.bf16.msra.mxu0 %v1403
      %1439 = vmatprep.subr.bf16.mxu0 0
      %1440 = vmatpush1.bf16.msra.mxu0 %v1404
      %1441 = vmatprep.subr.bf16.mxu0 0
      %1442 = vmatpush1.bf16.msra.mxu0 %v1405
      %1443 = vmatprep.subr.bf16.mxu0 0
      %1444 = vmatpush1.bf16.msra.mxu0 %v1406
      %1445 = vmatprep.subr.bf16.mxu0 0
      %1446 = vmatpush1.bf16.msra.mxu0 %v1407
      %1447 = vmatprep.subr.bf16.mxu0 0
      %1448 = vmatpush1.bf16.msra.mxu0 0
      %1449 = vmatprep.subr.bf16.mxu0 0
      %1450 = vmatpush1.bf16.msra.mxu0 0
      %1451 = vmatprep.subr.bf16.mxu0 0
      %1452 = vmatpush1.bf16.msra.mxu0 0
      %1453 = vmatprep.subr.bf16.mxu0 0
      %1454 = vmatpush1.bf16.msra.mxu0 0
      %1455 = vmatprep.mubr.bf16.mxu0 %v996
      %1456 = vmatmul.mubr.bf16.gmra.mrb[0].mxu0 %v833
      %v1457 = vpop.f32.mrb[0].mxu0
      %v1458 = vadd.f32 0.0, %v1457
      %v1459 = vpop.f32.mrb[0].mxu0
      %v1460 = vpop.f32.mrb[0].mxu0
      %v1461 = vadd.f32 0.0, %v1460
      %v1462 = vpop.f32.mrb[0].mxu0
      %1463 = vmatprep.mubr.bf16.mxu0 %v999
      %1464 = vmatmul.mubr.bf16.gmra.mrb[0].mxu0 %v837
      %v1465 = vpop.f32.mrb[0].mxu0
      %v1466 = vadd.f32 0.0, %v1465
      %v1467 = vpop.f32.mrb[0].mxu0
      %v1468 = vpop.f32.mrb[0].mxu0
      %v1469 = vadd.f32 0.0, %v1468
      %v1470 = vpop.f32.mrb[0].mxu0
      %1471 = vmatprep.mubr.bf16.mxu0 %v1002
      %1472 = vmatmul.mubr.bf16.gmra.mrb[0].mxu0 %v841
      %v1473 = vpop.f32.mrb[0].mxu0
      %v1474 = vadd.f32 0.0, %v1473
      %v1475 = vpop.f32.mrb[0].mxu0
      %v1476 = vpop.f32.mrb[0].mxu0
      %v1477 = vadd.f32 0.0, %v1476
      %v1478 = vpop.f32.mrb[0].mxu0
      %1479 = vmatprep.mubr.bf16.mxu0 %v1005
      %1480 = vmatmul.mubr.bf16.gmra.mrb[0].mxu0 %v845
      %v1481 = vpop.f32.mrb[0].mxu0
      %v1482 = vadd.f32 0.0, %v1481
      %v1483 = vpop.f32.mrb[0].mxu0
      %v1484 = vpop.f32.mrb[0].mxu0
      %v1485 = vadd.f32 0.0, %v1484
      %v1486 = vpop.f32.mrb[0].mxu0
      %1487 = vmatprep.mubr.bf16.mxu0 %v1008
      %1488 = vmatmul.mubr.bf16.gmra.mrb[0].mxu0 %v849
      %v1489 = vpop.f32.mrb[0].mxu0
      %v1490 = vadd.f32 0.0, %v1489
      %v1491 = vpop.f32.mrb[0].mxu0
      %v1492 = vpop.f32.mrb[0].mxu0
      %v1493 = vadd.f32 0.0, %v1492
      %v1494 = vpop.f32.mrb[0].mxu0
      %1495 = vmatprep.mubr.bf16.mxu0 %v1011
      %1496 = vmatmul.mubr.bf16.gmra.mrb[0].mxu0 %v853
      %v1497 = vpop.f32.mrb[0].mxu0
      %v1498 = vadd.f32 0.0, %v1497
      %v1499 = vpop.f32.mrb[0].mxu0
      %v1500 = vpop.f32.mrb[0].mxu0
      %v1501 = vadd.f32 0.0, %v1500
      %v1502 = vpop.f32.mrb[0].mxu0
      %1503 = vmatprep.mubr.bf16.mxu0 %v1014
      %1504 = vmatmul.mubr.bf16.gmra.mrb[0].mxu0 %v857
      %v1505 = vpop.f32.mrb[0].mxu0
      %v1506 = vadd.f32 0.0, %v1505
      %v1507 = vpop.f32.mrb[0].mxu0
      %v1508 = vpop.f32.mrb[0].mxu0
      %v1509 = vadd.f32 0.0, %v1508
      %v1510 = vpop.f32.mrb[0].mxu0
      %1511 = vmatprep.mubr.bf16.mxu0 %v1017
      %1512 = vmatmul.mubr.bf16.gmra.mrb[0].mxu0 %v861
      %v1513 = vpop.f32.mrb[0].mxu0
      %v1514 = vadd.f32 0.0, %v1513
      %v1515 = vpop.f32.mrb[0].mxu0
      %v1516 = vpop.f32.mrb[0].mxu0
      %v1517 = vadd.f32 0.0, %v1516
      %v1518 = vpop.f32.mrb[0].mxu0
      %1519 = vmatprep.mubr.bf16.mxu0 %v1020
      %1520 = vmatmul.mubr.bf16.gmra.mrb[0].mxu0 %v865
      %v1521 = vpop.f32.mrb[0].mxu0
      %v1522 = vadd.f32 0.0, %v1521
      %v1523 = vpop.f32.mrb[0].mxu0
      %v1524 = vpop.f32.mrb[0].mxu0
      %v1525 = vadd.f32 0.0, %v1524
      %v1526 = vpop.f32.mrb[0].mxu0
      %1527 = vmatprep.mubr.bf16.mxu0 %v1421
      %1528 = vmatmul.mubr.bf16.gmra.mrb[0].mxu0 %v869
      %v1529 = vpop.f32.mrb[0].mxu0
      %v1530 = vadd.f32 0.0, %v1529
      %v1531 = vpop.f32.mrb[0].mxu0
      %v1532 = vpop.f32.mrb[0].mxu0
      %v1533 = vadd.f32 0.0, %v1532
      %v1534 = vpop.f32.mrb[0].mxu0
      %1535 = vdwg.mxu0
      %v1536 = vadd.f32 %v1245, %v1458
      %v1537 = vadd.f32 %v1248, %v1461
      %v1538 = vadd.f32 %v1253, %v1466
      %v1539 = vadd.f32 %v1256, %v1469
      %v1540 = vadd.f32 %v1261, %v1474
      %v1541 = vadd.f32 %v1264, %v1477
      %v1542 = vadd.f32 %v1269, %v1482
      %v1543 = vadd.f32 %v1272, %v1485
      %v1544 = vadd.f32 %v1277, %v1490
      %v1545 = vadd.f32 %v1280, %v1493
      %v1546 = vadd.f32 %v1285, %v1498
      %v1547 = vadd.f32 %v1288, %v1501
      %v1548 = vadd.f32 %v1293, %v1506
      %v1549 = vadd.f32 %v1296, %v1509
      %v1550 = vadd.f32 %v1301, %v1514
      %v1551 = vadd.f32 %v1304, %v1517
      %v1552 = vadd.f32 %v1309, %v1522
      %v1553 = vadd.f32 %v1312, %v1525
      %v1554 = vadd.f32 %v1317, %v1530
      %v1555 = vadd.f32 %v1320, %v1533
      %v1556 = vld [vmem:[%s5] sm:$0x1]
      %v1558 = vlaneseq
      %v1559 = vshrl.u32 %v1558, 7
      %v1560 = vsub.s32 0, %v1559
      %v1561 = vrot.slane %v1556, %v1560
      %v1563 = vmul.f32 %v1536, %v1561
      %v1564 = vmul.f32 %v1537, %v1561
      %v1565 = vmul.f32 %v1538, %v1561
      %v1566 = vmul.f32 %v1539, %v1561
      %v1567 = vmul.f32 %v1540, %v1561
      %v1568 = vmul.f32 %v1541, %v1561
      %v1569 = vmul.f32 %v1542, %v1561
      %v1570 = vmul.f32 %v1543, %v1561
      %v1571 = vmul.f32 %v1544, %v1561
      %v1572 = vmul.f32 %v1545, %v1561
      %v1573 = vmul.f32 %v1546, %v1561
      %v1574 = vmul.f32 %v1547, %v1561
      %v1575 = vmul.f32 %v1548, %v1561
      %v1576 = vmul.f32 %v1549, %v1561
      %v1577 = vmul.f32 %v1550, %v1561
      %v1578 = vmul.f32 %v1551, %v1561
      %v1579 = vmul.f32 %v1552, %v1561
      %v1580 = vmul.f32 %v1553, %v1561
      %v1581 = vmul.f32 %v1554, %v1561
      %v1582 = vmul.f32 %v1555, %v1561
      %v1583 = vld [vmem:[%s6] sm:$0x1]
      %v1585 = vlaneseq
      %v1586 = vshrl.u32 %v1585, 7
      %v1587 = vsub.s32 0, %v1586
      %v1588 = vrot.slane %v1583, %v1587
      %v1590 = vadd.f32 %v1563, %v1588
      %v1591 = vadd.f32 %v1564, %v1588
      %v1592 = vadd.f32 %v1565, %v1588
      %v1593 = vadd.f32 %v1566, %v1588
      %v1594 = vadd.f32 %v1567, %v1588
      %v1595 = vadd.f32 %v1568, %v1588
      %v1596 = vadd.f32 %v1569, %v1588
      %v1597 = vadd.f32 %v1570, %v1588
      %v1598 = vadd.f32 %v1571, %v1588
      %v1599 = vadd.f32 %v1572, %v1588
      %v1600 = vadd.f32 %v1573, %v1588
      %v1601 = vadd.f32 %v1574, %v1588
      %v1602 = vadd.f32 %v1575, %v1588
      %v1603 = vadd.f32 %v1576, %v1588
      %v1604 = vadd.f32 %v1577, %v1588
      %v1605 = vadd.f32 %v1578, %v1588
      %v1606 = vadd.f32 %v1579, %v1588
      %v1607 = vadd.f32 %v1580, %v1588
      %v1608 = vadd.f32 %v1581, %v1588
      %v1609 = vadd.f32 %v1582, %v1588
      %v1610 = vmax.f32 %v1590, 0.0
      %v1611 = vmax.f32 %v1591, 0.0
      %v1612 = vmax.f32 %v1592, 0.0
      %v1613 = vmax.f32 %v1593, 0.0
      %v1614 = vmax.f32 %v1594, 0.0
      %v1615 = vmax.f32 %v1595, 0.0
      %v1616 = vmax.f32 %v1596, 0.0
      %v1617 = vmax.f32 %v1597, 0.0
      %v1618 = vmax.f32 %v1598, 0.0
      %v1619 = vmax.f32 %v1599, 0.0
      %v1620 = vmax.f32 %v1600, 0.0
      %v1621 = vmax.f32 %v1601, 0.0
      %v1622 = vmax.f32 %v1602, 0.0
      %v1623 = vmax.f32 %v1603, 0.0
      %v1624 = vmax.f32 %v1604, 0.0
      %v1625 = vmax.f32 %v1605, 0.0
      %v1626 = vmax.f32 %v1606, 0.0
      %v1627 = vmax.f32 %v1607, 0.0
      %v1628 = vmax.f32 %v1608, 0.0
      %v1629 = vmax.f32 %v1609, 0.0
      %v1630 = vpack.c.bf16 %v1611, %v1610
      %v1631 = vpack.c.bf16 %v1613, %v1612
      %v1632 = vpack.c.bf16 %v1615, %v1614
      %v1633 = vpack.c.bf16 %v1617, %v1616
      %v1634 = vpack.c.bf16 %v1619, %v1618
      %v1635 = vpack.c.bf16 %v1621, %v1620
      %v1636 = vpack.c.bf16 %v1623, %v1622
      %v1637 = vpack.c.bf16 %v1625, %v1624
      %v1638 = vpack.c.bf16 %v1627, %v1626
      %v1639 = vpack.c.bf16 %v1629, %v1628
      %1640 = vst.msk [vmem:[#allocation2] sm:$0xff] %vm822, %v1630
      %1641 = vst.msk [vmem:[#allocation2 + $0x8] sm:$0xff] %vm822, %v1631
      %1642 = vst.msk [vmem:[#allocation2 + $0x10] sm:$0xff] %vm822, %v1632
      %1643 = vst.msk [vmem:[#allocation2 + $0x18] sm:$0xff] %vm822, %v1633
      %1644 = vst.msk [vmem:[#allocation2 + $0x20] sm:$0xff] %vm822, %v1634
      %1645 = vst.msk [vmem:[#allocation2 + $0x28] sm:$0xff] %vm822, %v1635
      %1646 = vst.msk [vmem:[#allocation2 + $0x30] sm:$0xff] %vm822, %v1636
      %1647 = vst.msk [vmem:[#allocation2 + $0x38] sm:$0xff] %vm822, %v1637
      %1648 = vst.msk [vmem:[#allocation2 + $0x40] sm:$0xff] %vm822, %v1638
      %1649 = vst.msk [vmem:[#allocation2 + $0x48] sm:$0xff] %vm822, %v1639
      %p1650 = scmp.eq.s32.totalorder %s25, 0
      // Predicated region
      $region57: #{basic_block_forward.1} parent=55 // pred_check
        %p1651 = pneg %p1650
      $region58: #{basic_block_forward.1} parent=55 // pred_check_branch
        %1653 = sbr.rel (%p1651) target = $region60
      $region59: #{basic_block_forward.1} parent=55 // pred_region
        %1654 = vst.msk [vmem:[#allocation2] sm:$0xff] %vm822, 0
      $region60: #{basic_block_forward.1} parent=55 // pred_fallthru
        _
      %p1655 = scmp.eq.s32.totalorder %s25, 1
      // Predicated region
      $region61: #{basic_block_forward.1} parent=55 // pred_check
        %p1656 = pneg %p1655
      $region62: #{basic_block_forward.1} parent=55 // pred_check_branch
        %1658 = sbr.rel (%p1656) target = $region64
      $region63: #{basic_block_forward.1} parent=55 // pred_region
        %s1659 = scalar_lea.vmem [#allocation2], 72
        %1660 = vst.msk [vmem:[%s1659] sm:$0xff] %vm822, 0
      $region64: #{basic_block_forward.1} parent=55 // pred_fallthru
        _
      %v1661 = vld [vmem:[#allocation2] sm:$0xff]
      %v1662 = vld [vmem:[#allocation2 + $0x8] sm:$0xff]
      %v1663 = vld [vmem:[#allocation2 + $0x10] sm:$0xff]
      %v1664 = vld [vmem:[#allocation2 + $0x18] sm:$0xff]
      %v1665 = vld [vmem:[#allocation2 + $0x20] sm:$0xff]
      %v1666 = vld [vmem:[#allocation2 + $0x28] sm:$0xff]
      %v1667 = vld [vmem:[#allocation2 + $0x30] sm:$0xff]
      %v1668 = vld [vmem:[#allocation2 + $0x38] sm:$0xff]
      %v1669 = vld [vmem:[#allocation2 + $0x40] sm:$0xff]
      %v1670 = vld [vmem:[#allocation2 + $0x48] sm:$0xff]
      %v1672 = vshrl.u32 %v1661, 16
      %v1674 = vrot.slane %v1672, 7
      %v1675 = vshll.u32 %v1661, 16
      %v1677 = vor.u32 %v1674, %v1675
      %v1679 = vshrl.u32 %v1662, 16
      %v1681 = vrot.slane %v1679, 7
      %v1682 = vshll.u32 %v1662, 16
      %v1684 = vor.u32 %v1681, %v1682
      %v1686 = vshrl.u32 %v1663, 16
      %v1688 = vrot.slane %v1686, 7
      %v1689 = vshll.u32 %v1663, 16
      %v1691 = vor.u32 %v1688, %v1689
      %v1693 = vshrl.u32 %v1664, 16
      %v1695 = vrot.slane %v1693, 7
      %v1696 = vshll.u32 %v1664, 16
      %v1698 = vor.u32 %v1695, %v1696
      %v1700 = vshrl.u32 %v1665, 16
      %v1702 = vrot.slane %v1700, 7
      %v1703 = vshll.u32 %v1665, 16
      %v1705 = vor.u32 %v1702, %v1703
      %v1707 = vshrl.u32 %v1666, 16
      %v1709 = vrot.slane %v1707, 7
      %v1710 = vshll.u32 %v1666, 16
      %v1712 = vor.u32 %v1709, %v1710
      %v1714 = vshrl.u32 %v1667, 16
      %v1716 = vrot.slane %v1714, 7
      %v1717 = vshll.u32 %v1667, 16
      %v1719 = vor.u32 %v1716, %v1717
      %v1721 = vshrl.u32 %v1668, 16
      %v1723 = vrot.slane %v1721, 7
      %v1724 = vshll.u32 %v1668, 16
      %v1726 = vor.u32 %v1723, %v1724
      %v1728 = vshrl.u32 %v1669, 16
      %v1730 = vrot.slane %v1728, 7
      %v1731 = vshll.u32 %v1669, 16
      %v1733 = vor.u32 %v1730, %v1731
      %v1735 = vshrl.u32 %v1670, 16
      %v1737 = vrot.slane %v1735, 7
      %v1738 = vshll.u32 %v1670, 16
      %v1740 = vor.u32 %v1737, %v1738
      %v1751 = vsel %vm734, 0, %v1677
      %v1752 = vsel %vm734, 0, %v1684
      %v1753 = vsel %vm734, 0, %v1691
      %v1754 = vsel %vm734, 0, %v1698
      %v1755 = vsel %vm734, 0, %v1705
      %v1756 = vsel %vm734, 0, %v1712
      %v1757 = vsel %vm734, 0, %v1719
      %v1758 = vsel %vm734, 0, %v1726
      %v1759 = vsel %vm734, 0, %v1733
      %v1760 = vsel %vm734, 0, %v1740
      %v1761 = vrot.slane %v1675, 1
      %v1762 = vor.u32 %v1672, %v1761
      %v1763 = vrot.slane %v1682, 1
      %v1764 = vor.u32 %v1679, %v1763
      %v1765 = vrot.slane %v1689, 1
      %v1766 = vor.u32 %v1686, %v1765
      %v1767 = vrot.slane %v1696, 1
      %v1768 = vor.u32 %v1693, %v1767
      %v1769 = vrot.slane %v1703, 1
      %v1770 = vor.u32 %v1700, %v1769
      %v1771 = vrot.slane %v1710, 1
      %v1772 = vor.u32 %v1707, %v1771
      %v1773 = vrot.slane %v1717, 1
      %v1774 = vor.u32 %v1714, %v1773
      %v1775 = vrot.slane %v1724, 1
      %v1776 = vor.u32 %v1721, %v1775
      %v1777 = vrot.slane %v1731, 1
      %v1778 = vor.u32 %v1728, %v1777
      %v1779 = vrot.slane %v1738, 1
      %v1780 = vor.u32 %v1735, %v1779
      %v1791 = vsel %vm785, %v1762, 0
      %v1792 = vsel %vm785, %v1764, 0
      %v1793 = vsel %vm785, %v1766, 0
      %v1794 = vsel %vm785, %v1768, 0
      %v1795 = vsel %vm785, %v1770, 0
      %v1796 = vsel %vm785, %v1772, 0
      %v1797 = vsel %vm785, %v1774, 0
      %v1798 = vsel %vm785, %v1776, 0
      %v1799 = vsel %vm785, %v1778, 0
      %v1800 = vsel %vm785, %v1780, 0
      %1811 = vrot.lane.b32.xlu0 %v1661, 64
      %v1812 = vpop.permute.xlu0 %1811
      %1813 = vrot.lane.b32.xlu0 %v1662, 64
      %v1814 = vpop.permute.xlu0 %1813
      %1815 = vrot.lane.b32.xlu0 %v1663, 64
      %v1816 = vpop.permute.xlu0 %1815
      %1817 = vrot.lane.b32.xlu0 %v1664, 64
      %v1818 = vpop.permute.xlu0 %1817
      %1819 = vrot.lane.b32.xlu0 %v1665, 64
      %v1820 = vpop.permute.xlu0 %1819
      %1821 = vrot.lane.b32.xlu0 %v1666, 64
      %v1822 = vpop.permute.xlu0 %1821
      %1823 = vrot.lane.b32.xlu0 %v1667, 64
      %v1824 = vpop.permute.xlu0 %1823
      %1825 = vrot.lane.b32.xlu0 %v1668, 64
      %v1826 = vpop.permute.xlu0 %1825
      %1827 = vrot.lane.b32.xlu0 %v1669, 64
      %v1828 = vpop.permute.xlu0 %1827
      %1829 = vrot.lane.b32.xlu0 %v1670, 64
      %v1830 = vpop.permute.xlu0 %1829
      %v1833 = vsel %vm822, %v1751, %v1812
      %v1837 = vsel %vm822, %v1752, %v1814
      %v1841 = vsel %vm822, %v1753, %v1816
      %v1845 = vsel %vm822, %v1754, %v1818
      %v1849 = vsel %vm822, %v1755, %v1820
      %v1853 = vsel %vm822, %v1756, %v1822
      %v1857 = vsel %vm822, %v1757, %v1824
      %v1861 = vsel %vm822, %v1758, %v1826
      %v1865 = vsel %vm822, %v1759, %v1828
      %v1869 = vsel %vm822, %v1760, %v1830
      %v1871 = vld [vmem:[%s4] sm:$0xf]
      %v1872 = vld [vmem:[%s4 + $0x4] sm:$0xf]
      %v1873 = vld [vmem:[%s4 + $0x8] sm:$0xf]
      %v1874 = vld [vmem:[%s4 + $0xc] sm:$0xf]
      %v1875 = vld [vmem:[%s4 + $0x10] sm:$0xf]
      %v1876 = vld [vmem:[%s4 + $0x14] sm:$0xf]
      %v1877 = vld [vmem:[%s4 + $0x18] sm:$0xf]
      %v1878 = vld [vmem:[%s4 + $0x1c] sm:$0xf]
      %v1879 = vld [vmem:[%s4 + $0x20] sm:$0xf]
      %v1880 = vld [vmem:[%s4 + $0x24] sm:$0xf]
      %v1881 = vld [vmem:[%s4 + $0x28] sm:$0xf]
      %v1882 = vld [vmem:[%s4 + $0x2c] sm:$0xf]
      %v1883 = vld [vmem:[%s4 + $0x30] sm:$0xf]
      %v1884 = vld [vmem:[%s4 + $0x34] sm:$0xf]
      %v1885 = vld [vmem:[%s4 + $0x38] sm:$0xf]
      %v1886 = vld [vmem:[%s4 + $0x3c] sm:$0xf]
      %v1887 = vld [vmem:[%s4 + $0x40] sm:$0xf]
      %v1888 = vld [vmem:[%s4 + $0x44] sm:$0xf]
      %v1889 = vld [vmem:[%s4 + $0x48] sm:$0xf]
      %v1890 = vld [vmem:[%s4 + $0x4c] sm:$0xf]
      %v1891 = vld [vmem:[%s4 + $0x50] sm:$0xf]
      %v1892 = vld [vmem:[%s4 + $0x54] sm:$0xf]
      %v1893 = vld [vmem:[%s4 + $0x58] sm:$0xf]
      %v1894 = vld [vmem:[%s4 + $0x5c] sm:$0xf]
      %s1895 = scalar_lea.vmem %s4, 96
      %v1896 = vld [vmem:[%s1895] sm:$0xf]
      %v1897 = vld [vmem:[%s1895 + $0x4] sm:$0xf]
      %v1898 = vld [vmem:[%s1895 + $0x8] sm:$0xf]
      %v1899 = vld [vmem:[%s1895 + $0xc] sm:$0xf]
      %v1900 = vld [vmem:[%s1895 + $0x10] sm:$0xf]
      %v1901 = vld [vmem:[%s1895 + $0x14] sm:$0xf]
      %v1902 = vld [vmem:[%s1895 + $0x18] sm:$0xf]
      %v1903 = vld [vmem:[%s1895 + $0x1c] sm:$0xf]
      %v1904 = vld [vmem:[%s1895 + $0x20] sm:$0xf]
      %v1905 = vld [vmem:[%s1895 + $0x24] sm:$0xf]
      %v1906 = vld [vmem:[%s1895 + $0x28] sm:$0xf]
      %v1907 = vld [vmem:[%s1895 + $0x2c] sm:$0xf]
      %v1908 = vld [vmem:[%s1895 + $0x30] sm:$0xf]
      %v1909 = vld [vmem:[%s1895 + $0x34] sm:$0xf]
      %v1910 = vld [vmem:[%s1895 + $0x38] sm:$0xf]
      %v1911 = vld [vmem:[%s1895 + $0x3c] sm:$0xf]
      %v1912 = vld [vmem:[%s1895 + $0x40] sm:$0xf]
      %v1913 = vld [vmem:[%s1895 + $0x44] sm:$0xf]
      %v1914 = vld [vmem:[%s1895 + $0x48] sm:$0xf]
      %v1915 = vld [vmem:[%s1895 + $0x4c] sm:$0xf]
      %v1916 = vld [vmem:[%s1895 + $0x50] sm:$0xf]
      %v1917 = vld [vmem:[%s1895 + $0x54] sm:$0xf]
      %v1918 = vld [vmem:[%s1895 + $0x58] sm:$0xf]
      %v1919 = vld [vmem:[%s1895 + $0x5c] sm:$0xf]
      %v1944 = vunpack.c.l.b16 %v1896
      %v1945 = vunpack.c.l.b16 %v1897
      %v1946 = vunpack.c.l.b16 %v1898
      %v1947 = vunpack.c.l.b16 %v1899
      %v1948 = vunpack.c.l.b16 %v1900
      %v1949 = vunpack.c.l.b16 %v1901
      %v1950 = vunpack.c.l.b16 %v1902
      %v1951 = vunpack.c.l.b16 %v1903
      %v1952 = vunpack.c.l.b16 %v1904
      %v1953 = vunpack.c.l.b16 %v1905
      %v1954 = vunpack.c.l.b16 %v1906
      %v1955 = vunpack.c.l.b16 %v1907
      %v1956 = vunpack.c.l.b16 %v1908
      %v1957 = vunpack.c.l.b16 %v1909
      %v1958 = vunpack.c.l.b16 %v1910
      %v1959 = vunpack.c.l.b16 %v1911
      %v1960 = vunpack.c.l.b16 %v1912
      %v1961 = vunpack.c.l.b16 %v1913
      %v1962 = vunpack.c.l.b16 %v1914
      %v1963 = vunpack.c.l.b16 %v1915
      %v1964 = vunpack.c.l.b16 %v1916
      %v1965 = vunpack.c.l.b16 %v1917
      %v1966 = vunpack.c.l.b16 %v1918
      %v1967 = vunpack.c.l.b16 %v1919
      %v1968 = vpack.c.b16 %v1945, %v1944
      %v1969 = vpack.c.b16 %v1947, %v1946
      %v1970 = vpack.c.b16 %v1949, %v1948
      %v1971 = vpack.c.b16 %v1951, %v1950
      %v1972 = vpack.c.b16 %v1953, %v1952
      %v1973 = vpack.c.b16 %v1955, %v1954
      %v1974 = vpack.c.b16 %v1957, %v1956
      %v1975 = vpack.c.b16 %v1959, %v1958
      %v1976 = vpack.c.b16 %v1961, %v1960
      %v1977 = vpack.c.b16 %v1963, %v1962
      %v1978 = vpack.c.b16 %v1965, %v1964
      %v1979 = vpack.c.b16 %v1967, %v1966
      %v1993 = vsel %vm822, %v1792, 0
      %v1996 = vsel %vm822, %v1793, 0
      %v1999 = vsel %vm822, %v1794, 0
      %v2002 = vsel %vm822, %v1795, 0
      %v2005 = vsel %vm822, %v1796, 0
      %v2008 = vsel %vm822, %v1797, 0
      %v2011 = vsel %vm822, %v1798, 0
      %v2014 = vsel %vm822, %v1799, 0
      %2016 = vmatprep.subr.bf16.mxu0 0
      %2017 = vmatpush1.bf16.msra.mxu0 %v1968
      %2018 = vmatprep.subr.bf16.mxu0 0
      %2019 = vmatpush1.bf16.msra.mxu0 %v1969
      %2020 = vmatprep.subr.bf16.mxu0 0
      %2021 = vmatpush1.bf16.msra.mxu0 %v1970
      %2022 = vmatprep.subr.bf16.mxu0 0
      %2023 = vmatpush1.bf16.msra.mxu0 %v1971
      %2024 = vmatprep.subr.bf16.mxu0 0
      %2025 = vmatpush1.bf16.msra.mxu0 %v1972
      %2026 = vmatprep.subr.bf16.mxu0 0
      %2027 = vmatpush1.bf16.msra.mxu0 %v1973
      %2028 = vmatprep.subr.bf16.mxu0 0
      %2029 = vmatpush1.bf16.msra.mxu0 %v1974
      %2030 = vmatprep.subr.bf16.mxu0 0
      %2031 = vmatpush1.bf16.msra.mxu0 %v1975
      %2032 = vmatprep.subr.bf16.mxu0 0
      %2033 = vmatpush1.bf16.msra.mxu0 %v1976
      %2034 = vmatprep.subr.bf16.mxu0 0
      %2035 = vmatpush1.bf16.msra.mxu0 %v1977
      %2036 = vmatprep.subr.bf16.mxu0 0
      %2037 = vmatpush1.bf16.msra.mxu0 %v1978
      %2038 = vmatprep.subr.bf16.mxu0 0
      %2039 = vmatpush1.bf16.msra.mxu0 %v1979
      %2040 = vmatprep.subr.bf16.mxu0 0
      %2041 = vmatpush1.bf16.msra.mxu0 0
      %2042 = vmatprep.subr.bf16.mxu0 0
      %2043 = vmatpush1.bf16.msra.mxu0 0
      %2044 = vmatprep.subr.bf16.mxu0 0
      %2045 = vmatpush1.bf16.msra.mxu0 0
      %2046 = vmatprep.subr.bf16.mxu0 0
      %2047 = vmatpush1.bf16.msra.mxu0 0
      %2048 = vmatprep.mubr.bf16.mxu0 %v1993
      %2049 = vmatmul.mubr.bf16.gmra.mrb[0].mxu0 %v1837
      %v2050 = vpop.f32.mrb[0].mxu0
      %v2051 = vadd.f32 0.0, %v2050
      %v2052 = vpop.f32.mrb[0].mxu0
      %v2053 = vpop.f32.mrb[0].mxu0
      %v2054 = vadd.f32 0.0, %v2053
      %v2055 = vpop.f32.mrb[0].mxu0
      %2056 = vmatprep.mubr.bf16.mxu0 %v1996
      %2057 = vmatmul.mubr.bf16.gmra.mrb[0].mxu0 %v1841
      %v2058 = vpop.f32.mrb[0].mxu0
      %v2059 = vadd.f32 0.0, %v2058
      %v2060 = vpop.f32.mrb[0].mxu0
      %v2061 = vpop.f32.mrb[0].mxu0
      %v2062 = vadd.f32 0.0, %v2061
      %v2063 = vpop.f32.mrb[0].mxu0
      %2064 = vmatprep.mubr.bf16.mxu0 %v1999
      %2065 = vmatmul.mubr.bf16.gmra.mrb[0].mxu0 %v1845
      %v2066 = vpop.f32.mrb[0].mxu0
      %v2067 = vadd.f32 0.0, %v2066
      %v2068 = vpop.f32.mrb[0].mxu0
      %v2069 = vpop.f32.mrb[0].mxu0
      %v2070 = vadd.f32 0.0, %v2069
      %v2071 = vpop.f32.mrb[0].mxu0
      %2072 = vmatprep.mubr.bf16.mxu0 %v2002
      %2073 = vmatmul.mubr.bf16.gmra.mrb[0].mxu0 %v1849
      %v2074 = vpop.f32.mrb[0].mxu0
      %v2075 = vadd.f32 0.0, %v2074
      %v2076 = vpop.f32.mrb[0].mxu0
      %v2077 = vpop.f32.mrb[0].mxu0
      %v2078 = vadd.f32 0.0, %v2077
      %v2079 = vpop.f32.mrb[0].mxu0
      %2080 = vmatprep.mubr.bf16.mxu0 %v2005
      %2081 = vmatmul.mubr.bf16.gmra.mrb[0].mxu0 %v1853
      %v2082 = vpop.f32.mrb[0].mxu0
      %v2083 = vadd.f32 0.0, %v2082
      %v2084 = vpop.f32.mrb[0].mxu0
      %v2085 = vpop.f32.mrb[0].mxu0
      %v2086 = vadd.f32 0.0, %v2085
      %v2087 = vpop.f32.mrb[0].mxu0
      %2088 = vmatprep.mubr.bf16.mxu0 %v2008
      %2089 = vmatmul.mubr.bf16.gmra.mrb[0].mxu0 %v1857
      %v2090 = vpop.f32.mrb[0].mxu0
      %v2091 = vadd.f32 0.0, %v2090
      %v2092 = vpop.f32.mrb[0].mxu0
      %v2093 = vpop.f32.mrb[0].mxu0
      %v2094 = vadd.f32 0.0, %v2093
      %v2095 = vpop.f32.mrb[0].mxu0
      %2096 = vmatprep.mubr.bf16.mxu0 %v2011
      %2097 = vmatmul.mubr.bf16.gmra.mrb[0].mxu0 %v1861
      %v2098 = vpop.f32.mrb[0].mxu0
      %v2099 = vadd.f32 0.0, %v2098
      %v2100 = vpop.f32.mrb[0].mxu0
      %v2101 = vpop.f32.mrb[0].mxu0
      %v2102 = vadd.f32 0.0, %v2101
      %v2103 = vpop.f32.mrb[0].mxu0
      %2104 = vmatprep.mubr.bf16.mxu0 %v2014
      %2105 = vmatmul.mubr.bf16.gmra.mrb[0].mxu0 %v1865
      %v2106 = vpop.f32.mrb[0].mxu0
      %v2107 = vadd.f32 0.0, %v2106
      %v2108 = vpop.f32.mrb[0].mxu0
      %v2109 = vpop.f32.mrb[0].mxu0
      %v2110 = vadd.f32 0.0, %v2109
      %v2111 = vpop.f32.mrb[0].mxu0
      %2112 = vdwg.mxu0
      %v2137 = vunpack.c.l.b16 %v1871
      %v2138 = vunpack.c.l.b16 %v1872
      %v2139 = vunpack.c.l.b16 %v1873
      %v2140 = vunpack.c.l.b16 %v1874
      %v2141 = vunpack.c.l.b16 %v1875
      %v2142 = vunpack.c.l.b16 %v1876
      %v2143 = vunpack.c.l.b16 %v1877
      %v2144 = vunpack.c.l.b16 %v1878
      %v2145 = vunpack.c.l.b16 %v1879
      %v2146 = vunpack.c.l.b16 %v1880
      %v2147 = vunpack.c.l.b16 %v1881
      %v2148 = vunpack.c.l.b16 %v1882
      %v2149 = vunpack.c.l.b16 %v1883
      %v2150 = vunpack.c.l.b16 %v1884
      %v2151 = vunpack.c.l.b16 %v1885
      %v2152 = vunpack.c.l.b16 %v1886
      %v2153 = vunpack.c.l.b16 %v1887
      %v2154 = vunpack.c.l.b16 %v1888
      %v2155 = vunpack.c.l.b16 %v1889
      %v2156 = vunpack.c.l.b16 %v1890
      %v2157 = vunpack.c.l.b16 %v1891
      %v2158 = vunpack.c.l.b16 %v1892
      %v2159 = vunpack.c.l.b16 %v1893
      %v2160 = vunpack.c.l.b16 %v1894
      %v2161 = vpack.c.b16 %v2138, %v2137
      %v2162 = vpack.c.b16 %v2140, %v2139
      %v2163 = vpack.c.b16 %v2142, %v2141
      %v2164 = vpack.c.b16 %v2144, %v2143
      %v2165 = vpack.c.b16 %v2146, %v2145
      %v2166 = vpack.c.b16 %v2148, %v2147
      %v2167 = vpack.c.b16 %v2150, %v2149
      %v2168 = vpack.c.b16 %v2152, %v2151
      %v2169 = vpack.c.b16 %v2154, %v2153
      %v2170 = vpack.c.b16 %v2156, %v2155
      %v2171 = vpack.c.b16 %v2158, %v2157
      %v2172 = vpack.c.b16 %v2160, %v2159
      %v2186 = vsel %vm822, %v1791, 0
      %2188 = vmatprep.subr.bf16.mxu0 0
      %2189 = vmatpush1.bf16.msra.mxu0 %v2161
      %2190 = vmatprep.subr.bf16.mxu0 0
      %2191 = vmatpush1.bf16.msra.mxu0 %v2162
      %2192 = vmatprep.subr.bf16.mxu0 0
      %2193 = vmatpush1.bf16.msra.mxu0 %v2163
      %2194 = vmatprep.subr.bf16.mxu0 0
      %2195 = vmatpush1.bf16.msra.mxu0 %v2164
      %2196 = vmatprep.subr.bf16.mxu0 0
      %2197 = vmatpush1.bf16.msra.mxu0 %v2165
      %2198 = vmatprep.subr.bf16.mxu0 0
      %2199 = vmatpush1.bf16.msra.mxu0 %v2166
      %2200 = vmatprep.subr.bf16.mxu0 0
      %2201 = vmatpush1.bf16.msra.mxu0 %v2167
      %2202 = vmatprep.subr.bf16.mxu0 0
      %2203 = vmatpush1.bf16.msra.mxu0 %v2168
      %2204 = vmatprep.subr.bf16.mxu0 0
      %2205 = vmatpush1.bf16.msra.mxu0 %v2169
      %2206 = vmatprep.subr.bf16.mxu0 0
      %2207 = vmatpush1.bf16.msra.mxu0 %v2170
      %2208 = vmatprep.subr.bf16.mxu0 0
      %2209 = vmatpush1.bf16.msra.mxu0 %v2171
      %2210 = vmatprep.subr.bf16.mxu0 0
      %2211 = vmatpush1.bf16.msra.mxu0 %v2172
      %2212 = vmatprep.subr.bf16.mxu0 0
      %2213 = vmatpush1.bf16.msra.mxu0 0
      %2214 = vmatprep.subr.bf16.mxu0 0
      %2215 = vmatpush1.bf16.msra.mxu0 0
      %2216 = vmatprep.subr.bf16.mxu0 0
      %2217 = vmatpush1.bf16.msra.mxu0 0
      %2218 = vmatprep.subr.bf16.mxu0 0
      %2219 = vmatpush1.bf16.msra.mxu0 0
      %2220 = vmatprep.mubr.bf16.mxu0 %v2186
      %2221 = vmatmul.mubr.bf16.gmra.mrb[0].mxu0 %v1833
      %v2222 = vpop.f32.mrb[0].mxu0
      %v2223 = vadd.f32 %v2051, %v2222
      %v2224 = vpop.f32.mrb[0].mxu0
      %v2225 = vpop.f32.mrb[0].mxu0
      %v2226 = vadd.f32 %v2054, %v2225
      %v2227 = vpop.f32.mrb[0].mxu0
      %2228 = vmatprep.mubr.bf16.mxu0 %v1993
      %2229 = vmatmul.mubr.bf16.gmra.mrb[0].mxu0 %v1837
      %v2230 = vpop.f32.mrb[0].mxu0
      %v2231 = vadd.f32 %v2059, %v2230
      %v2232 = vpop.f32.mrb[0].mxu0
      %v2233 = vpop.f32.mrb[0].mxu0
      %v2234 = vadd.f32 %v2062, %v2233
      %v2235 = vpop.f32.mrb[0].mxu0
      %2236 = vmatprep.mubr.bf16.mxu0 %v1996
      %2237 = vmatmul.mubr.bf16.gmra.mrb[0].mxu0 %v1841
      %v2238 = vpop.f32.mrb[0].mxu0
      %v2239 = vadd.f32 %v2067, %v2238
      %v2240 = vpop.f32.mrb[0].mxu0
      %v2241 = vpop.f32.mrb[0].mxu0
      %v2242 = vadd.f32 %v2070, %v2241
      %v2243 = vpop.f32.mrb[0].mxu0
      %2244 = vmatprep.mubr.bf16.mxu0 %v1999
      %2245 = vmatmul.mubr.bf16.gmra.mrb[0].mxu0 %v1845
      %v2246 = vpop.f32.mrb[0].mxu0
      %v2247 = vadd.f32 %v2075, %v2246
      %v2248 = vpop.f32.mrb[0].mxu0
      %v2249 = vpop.f32.mrb[0].mxu0
      %v2250 = vadd.f32 %v2078, %v2249
      %v2251 = vpop.f32.mrb[0].mxu0
      %2252 = vmatprep.mubr.bf16.mxu0 %v2002
      %2253 = vmatmul.mubr.bf16.gmra.mrb[0].mxu0 %v1849
      %v2254 = vpop.f32.mrb[0].mxu0
      %v2255 = vadd.f32 %v2083, %v2254
      %v2256 = vpop.f32.mrb[0].mxu0
      %v2257 = vpop.f32.mrb[0].mxu0
      %v2258 = vadd.f32 %v2086, %v2257
      %v2259 = vpop.f32.mrb[0].mxu0
      %2260 = vmatprep.mubr.bf16.mxu0 %v2005
      %2261 = vmatmul.mubr.bf16.gmra.mrb[0].mxu0 %v1853
      %v2262 = vpop.f32.mrb[0].mxu0
      %v2263 = vadd.f32 %v2091, %v2262
      %v2264 = vpop.f32.mrb[0].mxu0
      %v2265 = vpop.f32.mrb[0].mxu0
      %v2266 = vadd.f32 %v2094, %v2265
      %v2267 = vpop.f32.mrb[0].mxu0
      %2268 = vmatprep.mubr.bf16.mxu0 %v2008
      %2269 = vmatmul.mubr.bf16.gmra.mrb[0].mxu0 %v1857
      %v2270 = vpop.f32.mrb[0].mxu0
      %v2271 = vadd.f32 %v2099, %v2270
      %v2272 = vpop.f32.mrb[0].mxu0
      %v2273 = vpop.f32.mrb[0].mxu0
      %v2274 = vadd.f32 %v2102, %v2273
      %v2275 = vpop.f32.mrb[0].mxu0
      %2276 = vmatprep.mubr.bf16.mxu0 %v2011
      %2277 = vmatmul.mubr.bf16.gmra.mrb[0].mxu0 %v1861
      %v2278 = vpop.f32.mrb[0].mxu0
      %v2279 = vadd.f32 %v2107, %v2278
      %v2280 = vpop.f32.mrb[0].mxu0
      %v2281 = vpop.f32.mrb[0].mxu0
      %v2282 = vadd.f32 %v2110, %v2281
      %v2283 = vpop.f32.mrb[0].mxu0
      %2284 = vdwg.mxu0
      %s2285 = scalar_lea.vmem %s4, 192
      %v2286 = vld [vmem:[%s2285] sm:$0xf]
      %v2287 = vld [vmem:[%s2285 + $0x4] sm:$0xf]
      %v2288 = vld [vmem:[%s2285 + $0x8] sm:$0xf]
      %v2289 = vld [vmem:[%s2285 + $0xc] sm:$0xf]
      %v2290 = vld [vmem:[%s2285 + $0x10] sm:$0xf]
      %v2291 = vld [vmem:[%s2285 + $0x14] sm:$0xf]
      %v2292 = vld [vmem:[%s2285 + $0x18] sm:$0xf]
      %v2293 = vld [vmem:[%s2285 + $0x1c] sm:$0xf]
      %v2294 = vld [vmem:[%s2285 + $0x20] sm:$0xf]
      %v2295 = vld [vmem:[%s2285 + $0x24] sm:$0xf]
      %v2296 = vld [vmem:[%s2285 + $0x28] sm:$0xf]
      %v2297 = vld [vmem:[%s2285 + $0x2c] sm:$0xf]
      %v2298 = vld [vmem:[%s2285 + $0x30] sm:$0xf]
      %v2299 = vld [vmem:[%s2285 + $0x34] sm:$0xf]
      %v2300 = vld [vmem:[%s2285 + $0x38] sm:$0xf]
      %v2301 = vld [vmem:[%s2285 + $0x3c] sm:$0xf]
      %v2302 = vld [vmem:[%s2285 + $0x40] sm:$0xf]
      %v2303 = vld [vmem:[%s2285 + $0x44] sm:$0xf]
      %v2304 = vld [vmem:[%s2285 + $0x48] sm:$0xf]
      %v2305 = vld [vmem:[%s2285 + $0x4c] sm:$0xf]
      %v2306 = vld [vmem:[%s2285 + $0x50] sm:$0xf]
      %v2307 = vld [vmem:[%s2285 + $0x54] sm:$0xf]
      %v2308 = vld [vmem:[%s2285 + $0x58] sm:$0xf]
      %v2309 = vld [vmem:[%s2285 + $0x5c] sm:$0xf]
      %v2334 = vunpack.c.l.b16 %v2286
      %v2335 = vunpack.c.l.b16 %v2287
      %v2336 = vunpack.c.l.b16 %v2288
      %v2337 = vunpack.c.l.b16 %v2289
      %v2338 = vunpack.c.l.b16 %v2290
      %v2339 = vunpack.c.l.b16 %v2291
      %v2340 = vunpack.c.l.b16 %v2292
      %v2341 = vunpack.c.l.b16 %v2293
      %v2342 = vunpack.c.l.b16 %v2294
      %v2343 = vunpack.c.l.b16 %v2295
      %v2344 = vunpack.c.l.b16 %v2296
      %v2345 = vunpack.c.l.b16 %v2297
      %v2346 = vunpack.c.l.b16 %v2298
      %v2347 = vunpack.c.l.b16 %v2299
      %v2348 = vunpack.c.l.b16 %v2300
      %v2349 = vunpack.c.l.b16 %v2301
      %v2350 = vunpack.c.l.b16 %v2302
      %v2351 = vunpack.c.l.b16 %v2303
      %v2352 = vunpack.c.l.b16 %v2304
      %v2353 = vunpack.c.l.b16 %v2305
      %v2354 = vunpack.c.l.b16 %v2306
      %v2355 = vunpack.c.l.b16 %v2307
      %v2356 = vunpack.c.l.b16 %v2308
      %v2357 = vunpack.c.l.b16 %v2309
      %v2358 = vpack.c.b16 %v2335, %v2334
      %v2359 = vpack.c.b16 %v2337, %v2336
      %v2360 = vpack.c.b16 %v2339, %v2338
      %v2361 = vpack.c.b16 %v2341, %v2340
      %v2362 = vpack.c.b16 %v2343, %v2342
      %v2363 = vpack.c.b16 %v2345, %v2344
      %v2364 = vpack.c.b16 %v2347, %v2346
      %v2365 = vpack.c.b16 %v2349, %v2348
      %v2366 = vpack.c.b16 %v2351, %v2350
      %v2367 = vpack.c.b16 %v2353, %v2352
      %v2368 = vpack.c.b16 %v2355, %v2354
      %v2369 = vpack.c.b16 %v2357, %v2356
      %v2383 = vsel %vm822, %v1800, 0
      %2385 = vmatprep.subr.bf16.mxu0 0
      %2386 = vmatpush1.bf16.msra.mxu0 %v2358
      %2387 = vmatprep.subr.bf16.mxu0 0
      %2388 = vmatpush1.bf16.msra.mxu0 %v2359
      %2389 = vmatprep.subr.bf16.mxu0 0
      %2390 = vmatpush1.bf16.msra.mxu0 %v2360
      %2391 = vmatprep.subr.bf16.mxu0 0
      %2392 = vmatpush1.bf16.msra.mxu0 %v2361
      %2393 = vmatprep.subr.bf16.mxu0 0
      %2394 = vmatpush1.bf16.msra.mxu0 %v2362
      %2395 = vmatprep.subr.bf16.mxu0 0
      %2396 = vmatpush1.bf16.msra.mxu0 %v2363
      %2397 = vmatprep.subr.bf16.mxu0 0
      %2398 = vmatpush1.bf16.msra.mxu0 %v2364
      %2399 = vmatprep.subr.bf16.mxu0 0
      %2400 = vmatpush1.bf16.msra.mxu0 %v2365
      %2401 = vmatprep.subr.bf16.mxu0 0
      %2402 = vmatpush1.bf16.msra.mxu0 %v2366
      %2403 = vmatprep.subr.bf16.mxu0 0
      %2404 = vmatpush1.bf16.msra.mxu0 %v2367
      %2405 = vmatprep.subr.bf16.mxu0 0
      %2406 = vmatpush1.bf16.msra.mxu0 %v2368
      %2407 = vmatprep.subr.bf16.mxu0 0
      %2408 = vmatpush1.bf16.msra.mxu0 %v2369
      %2409 = vmatprep.subr.bf16.mxu0 0
      %2410 = vmatpush1.bf16.msra.mxu0 0
      %2411 = vmatprep.subr.bf16.mxu0 0
      %2412 = vmatpush1.bf16.msra.mxu0 0
      %2413 = vmatprep.subr.bf16.mxu0 0
      %2414 = vmatpush1.bf16.msra.mxu0 0
      %2415 = vmatprep.subr.bf16.mxu0 0
      %2416 = vmatpush1.bf16.msra.mxu0 0
      %2417 = vmatprep.mubr.bf16.mxu0 %v1996
      %2418 = vmatmul.mubr.bf16.gmra.mrb[0].mxu0 %v1841
      %v2419 = vpop.f32.mrb[0].mxu0
      %v2420 = vadd.f32 0.0, %v2419
      %v2421 = vpop.f32.mrb[0].mxu0
      %v2422 = vpop.f32.mrb[0].mxu0
      %v2423 = vadd.f32 0.0, %v2422
      %v2424 = vpop.f32.mrb[0].mxu0
      %2425 = vmatprep.mubr.bf16.mxu0 %v1999
      %2426 = vmatmul.mubr.bf16.gmra.mrb[0].mxu0 %v1845
      %v2427 = vpop.f32.mrb[0].mxu0
      %v2428 = vadd.f32 0.0, %v2427
      %v2429 = vpop.f32.mrb[0].mxu0
      %v2430 = vpop.f32.mrb[0].mxu0
      %v2431 = vadd.f32 0.0, %v2430
      %v2432 = vpop.f32.mrb[0].mxu0
      %2433 = vmatprep.mubr.bf16.mxu0 %v2002
      %2434 = vmatmul.mubr.bf16.gmra.mrb[0].mxu0 %v1849
      %v2435 = vpop.f32.mrb[0].mxu0
      %v2436 = vadd.f32 0.0, %v2435
      %v2437 = vpop.f32.mrb[0].mxu0
      %v2438 = vpop.f32.mrb[0].mxu0
      %v2439 = vadd.f32 0.0, %v2438
      %v2440 = vpop.f32.mrb[0].mxu0
      %2441 = vmatprep.mubr.bf16.mxu0 %v2005
      %2442 = vmatmul.mubr.bf16.gmra.mrb[0].mxu0 %v1853
      %v2443 = vpop.f32.mrb[0].mxu0
      %v2444 = vadd.f32 0.0, %v2443
      %v2445 = vpop.f32.mrb[0].mxu0
      %v2446 = vpop.f32.mrb[0].mxu0
      %v2447 = vadd.f32 0.0, %v2446
      %v2448 = vpop.f32.mrb[0].mxu0
      %2449 = vmatprep.mubr.bf16.mxu0 %v2008
      %2450 = vmatmul.mubr.bf16.gmra.mrb[0].mxu0 %v1857
      %v2451 = vpop.f32.mrb[0].mxu0
      %v2452 = vadd.f32 0.0, %v2451
      %v2453 = vpop.f32.mrb[0].mxu0
      %v2454 = vpop.f32.mrb[0].mxu0
      %v2455 = vadd.f32 0.0, %v2454
      %v2456 = vpop.f32.mrb[0].mxu0
      %2457 = vmatprep.mubr.bf16.mxu0 %v2011
      %2458 = vmatmul.mubr.bf16.gmra.mrb[0].mxu0 %v1861
      %v2459 = vpop.f32.mrb[0].mxu0
      %v2460 = vadd.f32 0.0, %v2459
      %v2461 = vpop.f32.mrb[0].mxu0
      %v2462 = vpop.f32.mrb[0].mxu0
      %v2463 = vadd.f32 0.0, %v2462
      %v2464 = vpop.f32.mrb[0].mxu0
      %2465 = vmatprep.mubr.bf16.mxu0 %v2014
      %2466 = vmatmul.mubr.bf16.gmra.mrb[0].mxu0 %v1865
      %v2467 = vpop.f32.mrb[0].mxu0
      %v2468 = vadd.f32 0.0, %v2467
      %v2469 = vpop.f32.mrb[0].mxu0
      %v2470 = vpop.f32.mrb[0].mxu0
      %v2471 = vadd.f32 0.0, %v2470
      %v2472 = vpop.f32.mrb[0].mxu0
      %2473 = vmatprep.mubr.bf16.mxu0 %v2383
      %2474 = vmatmul.mubr.bf16.gmra.mrb[0].mxu0 %v1869
      %v2475 = vpop.f32.mrb[0].mxu0
      %v2476 = vadd.f32 0.0, %v2475
      %v2477 = vpop.f32.mrb[0].mxu0
      %v2478 = vpop.f32.mrb[0].mxu0
      %v2479 = vadd.f32 0.0, %v2478
      %v2480 = vpop.f32.mrb[0].mxu0
      %2481 = vdwg.mxu0
      %v2482 = vadd.f32 %v2223, %v2420
      %v2483 = vadd.f32 %v2226, %v2423
      %v2484 = vadd.f32 %v2231, %v2428
      %v2485 = vadd.f32 %v2234, %v2431
      %v2486 = vadd.f32 %v2239, %v2436
      %v2487 = vadd.f32 %v2242, %v2439
      %v2488 = vadd.f32 %v2247, %v2444
      %v2489 = vadd.f32 %v2250, %v2447
      %v2490 = vadd.f32 %v2255, %v2452
      %v2491 = vadd.f32 %v2258, %v2455
      %v2492 = vadd.f32 %v2263, %v2460
      %v2493 = vadd.f32 %v2266, %v2463
      %v2494 = vadd.f32 %v2271, %v2468
      %v2495 = vadd.f32 %v2274, %v2471
      %v2496 = vadd.f32 %v2279, %v2476
      %v2497 = vadd.f32 %v2282, %v2479
      %v2498 = vld [vmem:[%s7] sm:$0x1]
      %v2500 = vlaneseq
      %v2501 = vshrl.u32 %v2500, 7
      %v2502 = vsub.s32 0, %v2501
      %v2503 = vrot.slane %v2498, %v2502
      %v2505 = vmul.f32 %v2482, %v2503
      %v2506 = vmul.f32 %v2483, %v2503
      %v2507 = vmul.f32 %v2484, %v2503
      %v2508 = vmul.f32 %v2485, %v2503
      %v2509 = vmul.f32 %v2486, %v2503
      %v2510 = vmul.f32 %v2487, %v2503
      %v2511 = vmul.f32 %v2488, %v2503
      %v2512 = vmul.f32 %v2489, %v2503
      %v2513 = vmul.f32 %v2490, %v2503
      %v2514 = vmul.f32 %v2491, %v2503
      %v2515 = vmul.f32 %v2492, %v2503
      %v2516 = vmul.f32 %v2493, %v2503
      %v2517 = vmul.f32 %v2494, %v2503
      %v2518 = vmul.f32 %v2495, %v2503
      %v2519 = vmul.f32 %v2496, %v2503
      %v2520 = vmul.f32 %v2497, %v2503
      %v2521 = vld [vmem:[%s8] sm:$0x1]
      %v2523 = vlaneseq
      %v2524 = vshrl.u32 %v2523, 7
      %v2525 = vsub.s32 0, %v2524
      %v2526 = vrot.slane %v2521, %v2525
      %v2528 = vadd.f32 %v2505, %v2526
      %v2529 = vadd.f32 %v2506, %v2526
      %v2530 = vadd.f32 %v2507, %v2526
      %v2531 = vadd.f32 %v2508, %v2526
      %v2532 = vadd.f32 %v2509, %v2526
      %v2533 = vadd.f32 %v2510, %v2526
      %v2534 = vadd.f32 %v2511, %v2526
      %v2535 = vadd.f32 %v2512, %v2526
      %v2536 = vadd.f32 %v2513, %v2526
      %v2537 = vadd.f32 %v2514, %v2526
      %v2538 = vadd.f32 %v2515, %v2526
      %v2539 = vadd.f32 %v2516, %v2526
      %v2540 = vadd.f32 %v2517, %v2526
      %v2541 = vadd.f32 %v2518, %v2526
      %v2542 = vadd.f32 %v2519, %v2526
      %v2543 = vadd.f32 %v2520, %v2526
      %v2544 = vld [vmem:[%s460] sm:$0xf]
      %v2545 = vld [vmem:[%s460 + $0x4] sm:$0xf]
      %v2546 = vld [vmem:[%s460 + $0x8] sm:$0xf]
      %v2547 = vld [vmem:[%s460 + $0xc] sm:$0xf]
      %v2548 = vld [vmem:[%s460 + $0x10] sm:$0xf]
      %v2549 = vld [vmem:[%s460 + $0x14] sm:$0xf]
      %v2550 = vld [vmem:[%s460 + $0x18] sm:$0xf]
      %v2551 = vld [vmem:[%s460 + $0x1c] sm:$0xf]
      %v2552 = vld [vmem:[%s460 + $0x20] sm:$0xf]
      %v2553 = vld [vmem:[%s460 + $0x24] sm:$0xf]
      %v2554 = vld [vmem:[%s460 + $0x28] sm:$0xf]
      %v2555 = vld [vmem:[%s460 + $0x2c] sm:$0xf]
      %v2556 = vld [vmem:[%s460 + $0x30] sm:$0xf]
      %v2557 = vld [vmem:[%s460 + $0x34] sm:$0xf]
      %v2558 = vld [vmem:[%s460 + $0x38] sm:$0xf]
      %v2559 = vld [vmem:[%s460 + $0x3c] sm:$0xf]
      %v2560 = vunpack.c.l.bf16 %v2544
      %v2561 = vunpack.c.l.bf16 %v2545
      %v2562 = vunpack.c.l.bf16 %v2546
      %v2563 = vunpack.c.l.bf16 %v2547
      %v2564 = vunpack.c.l.bf16 %v2548
      %v2565 = vunpack.c.l.bf16 %v2549
      %v2566 = vunpack.c.l.bf16 %v2550
      %v2567 = vunpack.c.l.bf16 %v2551
      %v2568 = vunpack.c.l.bf16 %v2552
      %v2569 = vunpack.c.l.bf16 %v2553
      %v2570 = vunpack.c.l.bf16 %v2554
      %v2571 = vunpack.c.l.bf16 %v2555
      %v2572 = vunpack.c.l.bf16 %v2556
      %v2573 = vunpack.c.l.bf16 %v2557
      %v2574 = vunpack.c.l.bf16 %v2558
      %v2575 = vunpack.c.l.bf16 %v2559
      %v2576 = vadd.f32 %v2528, %v2560
      %v2577 = vadd.f32 %v2529, %v2561
      %v2578 = vadd.f32 %v2530, %v2562
      %v2579 = vadd.f32 %v2531, %v2563
      %v2580 = vadd.f32 %v2532, %v2564
      %v2581 = vadd.f32 %v2533, %v2565
      %v2582 = vadd.f32 %v2534, %v2566
      %v2583 = vadd.f32 %v2535, %v2567
      %v2584 = vadd.f32 %v2536, %v2568
      %v2585 = vadd.f32 %v2537, %v2569
      %v2586 = vadd.f32 %v2538, %v2570
      %v2587 = vadd.f32 %v2539, %v2571
      %v2588 = vadd.f32 %v2540, %v2572
      %v2589 = vadd.f32 %v2541, %v2573
      %v2590 = vadd.f32 %v2542, %v2574
      %v2591 = vadd.f32 %v2543, %v2575
      %v2592 = vmax.f32 %v2576, 0.0
      %v2593 = vmax.f32 %v2577, 0.0
      %v2594 = vmax.f32 %v2578, 0.0
      %v2595 = vmax.f32 %v2579, 0.0
      %v2596 = vmax.f32 %v2580, 0.0
      %v2597 = vmax.f32 %v2581, 0.0
      %v2598 = vmax.f32 %v2582, 0.0
      %v2599 = vmax.f32 %v2583, 0.0
      %v2600 = vmax.f32 %v2584, 0.0
      %v2601 = vmax.f32 %v2585, 0.0
      %v2602 = vmax.f32 %v2586, 0.0
      %v2603 = vmax.f32 %v2587, 0.0
      %v2604 = vmax.f32 %v2588, 0.0
      %v2605 = vmax.f32 %v2589, 0.0
      %v2606 = vmax.f32 %v2590, 0.0
      %v2607 = vmax.f32 %v2591, 0.0
      %v2608 = vpack.c.bf16 %v2593, %v2592
      %v2609 = vpack.c.bf16 %v2595, %v2594
      %v2610 = vpack.c.bf16 %v2597, %v2596
      %v2611 = vpack.c.bf16 %v2599, %v2598
      %v2612 = vpack.c.bf16 %v2601, %v2600
      %v2613 = vpack.c.bf16 %v2603, %v2602
      %v2614 = vpack.c.bf16 %v2605, %v2604
      %v2615 = vpack.c.bf16 %v2607, %v2606
      %v2624 = vunpack.c.l.b16 %v2608
      %v2625 = vunpack.c.h.b16 %v2608
      %v2626 = vunpack.c.l.b16 %v2609
      %v2627 = vunpack.c.h.b16 %v2609
      %v2628 = vunpack.c.l.b16 %v2610
      %v2629 = vunpack.c.h.b16 %v2610
      %v2630 = vunpack.c.l.b16 %v2611
      %v2631 = vunpack.c.h.b16 %v2611
      %v2632 = vunpack.c.l.b16 %v2612
      %v2633 = vunpack.c.h.b16 %v2612
      %v2634 = vunpack.c.l.b16 %v2613
      %v2635 = vunpack.c.h.b16 %v2613
      %v2636 = vunpack.c.l.b16 %v2614
      %v2637 = vunpack.c.h.b16 %v2614
      %v2638 = vunpack.c.l.b16 %v2615
      %v2639 = vunpack.c.h.b16 %v2615
      %v2640 = vpack.c.b16 %v2624, %v2624
      %v2641 = vpack.c.b16 %v2625, %v2625
      %v2642 = vpack.c.b16 %v2626, %v2626
      %v2643 = vpack.c.b16 %v2627, %v2627
      %v2644 = vpack.c.b16 %v2628, %v2628
      %v2645 = vpack.c.b16 %v2629, %v2629
      %v2646 = vpack.c.b16 %v2630, %v2630
      %v2647 = vpack.c.b16 %v2631, %v2631
      %v2648 = vpack.c.b16 %v2632, %v2632
      %v2649 = vpack.c.b16 %v2633, %v2633
      %v2650 = vpack.c.b16 %v2634, %v2634
      %v2651 = vpack.c.b16 %v2635, %v2635
      %v2652 = vpack.c.b16 %v2636, %v2636
      %v2653 = vpack.c.b16 %v2637, %v2637
      %v2654 = vpack.c.b16 %v2638, %v2638
      %v2655 = vpack.c.b16 %v2639, %v2639
      %vm2672 = vcmask 519168
      %2673 = vst.msk [vmem:[%s509] sm:$0xf] %vm2672, %v2640
      %2674 = vst.msk [vmem:[%s509 + $0x4] sm:$0xf] %vm2672, %v2641
      %2675 = vst.msk [vmem:[%s509 + $0x8] sm:$0xf] %vm2672, %v2642
      %2676 = vst.msk [vmem:[%s509 + $0xc] sm:$0xf] %vm2672, %v2643
      %2677 = vst.msk [vmem:[%s509 + $0x10] sm:$0xf] %vm2672, %v2644
      %2678 = vst.msk [vmem:[%s509 + $0x14] sm:$0xf] %vm2672, %v2645
      %2679 = vst.msk [vmem:[%s509 + $0x18] sm:$0xf] %vm2672, %v2646
      %2680 = vst.msk [vmem:[%s509 + $0x1c] sm:$0xf] %vm2672, %v2647
      %2681 = vst.msk [vmem:[%s509 + $0x20] sm:$0xf] %vm2672, %v2648
      %2682 = vst.msk [vmem:[%s509 + $0x24] sm:$0xf] %vm2672, %v2649
      %2683 = vst.msk [vmem:[%s509 + $0x28] sm:$0xf] %vm2672, %v2650
      %2684 = vst.msk [vmem:[%s509 + $0x2c] sm:$0xf] %vm2672, %v2651
      %2685 = vst.msk [vmem:[%s509 + $0x30] sm:$0xf] %vm2672, %v2652
      %2686 = vst.msk [vmem:[%s509 + $0x34] sm:$0xf] %vm2672, %v2653
      %2687 = vst.msk [vmem:[%s509 + $0x38] sm:$0xf] %vm2672, %v2654
      %2688 = vst.msk [vmem:[%s509 + $0x3c] sm:$0xf] %vm2672, %v2655
      %s2689 = smul.u32 8, %s25
      %p2690 = scmp.lt.s32.totalorder %s24, 1
      %s2691 = scalar_select %p2690, %s24, 1
      %p2692 = scmp.lt.s32.totalorder %s2689, 15
      %s2693 = scalar_select %p2692, %s2689, 15
      %s2694 = smul.addr %s2693, 2
      %s2695 = smul.addr %s2691, 32
      %s2696 = sadd.s32 %s2694, %s2695
      %s2697 = smul.addr %s2696, 4
      %s2698 = scalar_lea.vmem %s9, %s2697
      // Predicated region
      $region65: #{basic_block_forward.1} parent=55 // pred_check
        %p2699 = pneg %p278
      $region66: #{basic_block_forward.1} parent=55 // pred_check_branch
        %2701 = sbr.rel (%p2699) target = $region68
      $region67: #{basic_block_forward.1} parent=55 // pred_region
        %s2702 = smul.u32 8, %s25
      $region68: #{basic_block_forward.1} parent=55 // pred_fallthru
        _
    $region56: #{basic_block_forward.1} parent=5 // pred_fallthru
      _
    %p2703 = scmp.le.s32.totalorder 2, %s15
    // Predicated region
    $region69: #{basic_block_forward.1} parent=5 // pred_check
      %p2704 = pneg %p2703
    $region70: #{basic_block_forward.1} parent=5 // pred_check_branch
      %2706 = sbr.rel (%p2704) target = $region72
    $region71: #{basic_block_forward.1} parent=5 // pred_region
      %s2707 = ssub.s32 %s15, 2
      // Predicated region
      $region73: #{basic_block_forward.1} parent=71 // pred_check
        %p2708 = pneg %p284
      $region74: #{basic_block_forward.1} parent=71 // pred_check_branch
        %2710 = sbr.rel (%p2708) target = $region76
      $region75: #{basic_block_forward.1} parent=71 // pred_region
        %s2711 = smul.u32 8, %s27
        %p2712 = scmp.lt.s32.totalorder %s26, 1
        %s2713 = scalar_select %p2712, %s26, 1
        %p2714 = scmp.lt.s32.totalorder %s2711, 15
        %s2715 = scalar_select %p2714, %s2711, 15
        %s2716 = smul.addr %s2715, 2
        %s2717 = smul.addr %s2713, 32
        %s2718 = sadd.s32 %s2716, %s2717
        %s2719 = smul.addr %s2718, 4
        %s2720 = scalar_lea.vmem %s9, %s2719
      $region76: #{basic_block_forward.1} parent=71 // pred_fallthru
        _
    $region72: #{basic_block_forward.1} parent=5 // pred_fallthru
      _
  $region6: #{basic_block_forward.1} parent=0 // loop_footer
    %s19 = sadd.s32 1, %s15
  $region7: #{basic_block_forward.1} parent=0 // loop_footer_branch
    %14 = sbr.rel target = $region3
  $region8: #{basic_block_forward.1} parent=0 // loop_exit
    _

</llo_original>
